<compile_context>
chip_gen: v6e
topology: v6e:2x2x1
jax: 0.10.0
libtpu: 0.0.40
codegen_flags: <defaults>
</compile_context>

<pallas_src>
import functools

import jax
import jax.numpy as jnp
from jax import lax
from jax.experimental import pallas as pl
from jax.experimental.pallas import tpu as pltpu


def _fused_kernel(scale, q_ref, kv_ref, wq_ref, wkv_ref, wproj_ref, bproj_ref,
                  sel_ref, plc_ref, out_ref, q_state):
    """One grid step == one affinity-attention iteration; final proj fused in."""
    it = pl.program_id(0)
    n_it = pl.num_programs(0)

    B, Nq, C = q_state.shape
    _, Nkv, ico = kv_ref.shape
    k_split = sel_ref.shape[0]          # C // Nq

    @pl.when(it == 0)
    def _init():
        q_state[...] = q_ref[...].astype(jnp.float32)

    # ---- projections: batch folded in, contract on dim 1 of the weight (x @ W^T) ----
    dn_xwt = (((1,), (1,)), ((), ()))
    q2 = q_state[...].reshape(B * Nq, C)
    kv2 = kv_ref[...].astype(jnp.float32).reshape(B * Nkv, ico)

    qp = lax.dot_general(q2, wq_ref[...], dn_xwt,
                         preferred_element_type=jnp.float32)          # (B*Nq, C)
    kvp = lax.dot_general(kv2, wkv_ref[...], dn_xwt,
                          preferred_element_type=jnp.float32)         # (B*Nkv, 2C)

    qp3 = qp.reshape(B, Nq, C)
    k3 = kvp[:, :C].reshape(B, Nkv, C)                                # "k" half
    v3 = kvp[:, C:].reshape(B, Nkv, C)                                # "v" half

    # ---- scaled dot-product attention, softmax over kv tokens ----
    attn = jnp.einsum("bnd,bmd->bnm", qp3, k3,
                      preferred_element_type=jnp.float32) * scale     # (B, Nq, Nkv)
    attn = jnp.exp(attn - jnp.max(attn, axis=-1, keepdims=True))
    attn = attn * pl.reciprocal(jnp.sum(attn, axis=-1, keepdims=True), approx=True)
    out3 = jnp.einsum("bnm,bmd->bnd", attn, v3,
                      preferred_element_type=jnp.float32)             # (B, Nq, C)

    # ---- PyTorch (attn @ v).transpose(1, 2).reshape(B, Nq, C) scramble ----
    # q_new[b, p, j*Nq + s] = out3[b, s, p*k_split + j]
    # Implemented as k_split pairs of batched matmuls with constant 0/1 matrices
    # (selection sel_ref[j] and placement plc_ref[j]) -> pure MXU, no relayouts.
    new_q = None
    for j in range(k_split):
        sj = jnp.broadcast_to(sel_ref[j], (B, Nq, C))                 # 'bpc'
        hj = jnp.broadcast_to(plc_ref[j], (B, Nq, C))                 # 'bsq'
        blk = jnp.einsum("bpc,bsc->bps", sj, out3,
                         preferred_element_type=jnp.float32)          # (B, Nq, Nq)
        term = jnp.einsum("bps,bsq->bpq", blk, hj,
                          preferred_element_type=jnp.float32)         # (B, Nq, C)
        new_q = term if new_q is None else new_q + term
    q_state[...] = new_q

    # ---- fused output projection on the last iteration ----
    @pl.when(it == n_it - 1)
    def _final():
        qf = new_q.reshape(B * Nq, C)
        x = lax.dot_general(qf, wproj_ref[...], dn_xwt,
                            preferred_element_type=jnp.float32) + bproj_ref[...]
        out_ref[...] = x.reshape(B, Nq, C).astype(out_ref.dtype)


def sa_affinity_attention(q, kv, wq_stack, wkv_stack, w_proj, b_proj, *, qk_scale=None):
    """Pallas implementation of SA_affinity_attention.forward (dropout p=0.0)."""
    B, Nq, C = q.shape
    _, Nkv, ico = kv.shape
    iters = wq_stack.shape[0]
    scale = qk_scale if qk_scale is not None else C ** (-0.5)

    # TODO(synk): support erp_dim % N_q != 0 — the matmul-based in-kernel scramble
    # below needs C (erp_dim) to be a multiple of N_q; other shapes would need a
    # general in-kernel relayout.
    assert C % Nq == 0, "fused kernel requires erp_dim % N_q == 0"
    k_split = C // Nq

    # Constant 0/1 matrices for the scramble (built once, tiny):
    #   sel[j][p, c] = 1  iff c == p*k_split + j        (column selection)
    #   plc[j][s, q] = 1  iff q == j*Nq + s             (column-block placement)
    p_idx = jnp.arange(Nq)
    sel = jnp.stack([jax.nn.one_hot(p_idx * k_split + j, C, dtype=jnp.float32)
                     for j in range(k_split)])                        # (k, Nq, C)
    plc = jnp.stack([jax.nn.one_hot(p_idx + j * Nq, C, dtype=jnp.float32)
                     for j in range(k_split)])                        # (k, Nq, C)

    flops = iters * (2 * B * Nq * C * C          # q projection
                     + 2 * B * Nkv * ico * 2 * C  # kv projection
                     + 4 * B * Nq * Nkv * C       # q@k^T and attn@v
                     + 4 * k_split * B * Nq * Nq * C)  # scramble matmuls
    flops += 2 * B * Nq * C * C                  # final proj
    cost = pl.CostEstimate(
        flops=int(flops),
        transcendentals=int(iters * B * Nq * Nkv),
        bytes_accessed=int(4 * (q.size + kv.size + wq_stack.size + wkv_stack.size
                                + w_proj.size + b_proj.size + q.size)))

    return pl.pallas_call(
        functools.partial(_fused_kernel, scale),
        out_shape=jax.ShapeDtypeStruct((B, Nq, C), q.dtype),
        grid=(iters,),
        in_specs=[
            pl.BlockSpec((B, Nq, C), lambda i: (0, 0, 0)),           # q   (used at step 0)
            pl.BlockSpec((B, Nkv, ico), lambda i: (0, 0, 0)),        # kv
            pl.BlockSpec((None, C, C), lambda i: (i, 0, 0)),         # wq_stack[i]
            pl.BlockSpec((None, 2 * C, ico), lambda i: (i, 0, 0)),   # wkv_stack[i]
            pl.BlockSpec((C, C), lambda i: (0, 0)),                  # w_proj
            pl.BlockSpec((1, C), lambda i: (0, 0)),                  # b_proj
            pl.BlockSpec((k_split, Nq, C), lambda i: (0, 0, 0)),     # scramble selection
            pl.BlockSpec((k_split, Nq, C), lambda i: (0, 0, 0)),     # scramble placement
        ],
        out_specs=pl.BlockSpec((B, Nq, C), lambda i: (0, 0, 0)),
        scratch_shapes=[pltpu.VMEM((B, Nq, C), jnp.float32)],        # carried q state
        compiler_params=pltpu.CompilerParams(dimension_semantics=("arbitrary",)),
        cost_estimate=cost,
    )(q, kv, wq_stack, wkv_stack, w_proj, b_proj.reshape(1, C), sel, plc)


def _reference(q, kv, wq_stack, wkv_stack, w_proj, b_proj, *, qk_scale=None):
    """Pure-JAX mirror of the PyTorch forward, for correctness checking."""
    B, Nq, C = q.shape
    iters = wq_stack.shape[0]
    scale = qk_scale if qk_scale is not None else C ** (-0.5)
    for i in range(iters):
        q_ = jnp.einsum("bnc,dc->bnd", q, wq_stack[i])
        kv_ = jnp.einsum("bmc,dc->bmd", kv, wkv_stack[i])             # (B, Nkv, 2C)
        kv_ = kv_.reshape(B, -1, 2, C).transpose(2, 0, 1, 3)
        k, v = kv_[0], kv_[1]
        attn = jnp.einsum("bnd,bmd->bnm", q_, k) * scale
        attn = jax.nn.softmax(attn, axis=-1)
        out = jnp.einsum("bnm,bmd->bnd", attn, v)
        q = jnp.transpose(out, (0, 2, 1)).reshape(B, Nq, C)
    return jnp.einsum("bnc,dc->bnd", q, w_proj) + b_proj


if __name__ == "__main__":
    # Small synthetic config: erp_dim=32, ico_dim=16, iteration=2.
    B, N_q, N_kv = 2, 16, 8
    erp_dim, ico_dim, iters = 32, 16, 2

    key = jax.random.PRNGKey(0)
    k_q, k_kv, k_wq, k_wkv, k_wp, k_bp = jax.random.split(key, 6)

    q = jax.random.normal(k_q, (B, N_q, erp_dim), dtype=jnp.float32)
    kv = jax.random.normal(k_kv, (B, N_kv, ico_dim), dtype=jnp.float32)

    # Parameter shapes match nn.Linear weights: (out_features, in_features).
    wq_stack = 0.1 * jax.random.normal(k_wq, (iters, erp_dim, erp_dim), dtype=jnp.float32)
    wkv_stack = 0.1 * jax.random.normal(k_wkv, (iters, 2 * erp_dim, ico_dim), dtype=jnp.float32)
    w_proj = 0.1 * jax.random.normal(k_wp, (erp_dim, erp_dim), dtype=jnp.float32)
    b_proj = 0.1 * jax.random.normal(k_bp, (erp_dim,), dtype=jnp.float32)

    out = sa_affinity_attention(q, kv, wq_stack, wkv_stack, w_proj, b_proj)
    out = jax.block_until_ready(out)

    ref = _reference(q, kv, wq_stack, wkv_stack, w_proj, b_proj)
    assert out.shape == (B, N_q, erp_dim)
    # approx=True reciprocal in the softmax => slightly looser tolerance than exact f32.
    assert jnp.allclose(out, ref, atol=2e-3, rtol=2e-3), "mismatch vs pure-JAX reference"

    print("KERNEL_OK")
</pallas_src>

<mosaic_0001>
module attributes {stable_mosaic.version = 11 : i64} {
  func.func @_fused_kernel(%arg0: i32, %arg1: memref<2x16x32xf32, #tpu.memory_space<vmem>>, %arg2: memref<2x8x16xf32, #tpu.memory_space<vmem>>, %arg3: memref<1x32x32xf32, #tpu.memory_space<vmem>>, %arg4: memref<1x64x16xf32, #tpu.memory_space<vmem>>, %arg5: memref<32x32xf32, #tpu.memory_space<vmem>>, %arg6: memref<1x32xf32, #tpu.memory_space<vmem>>, %arg7: memref<2x16x32xf32, #tpu.memory_space<vmem>>, %arg8: memref<2x16x32xf32, #tpu.memory_space<vmem>>, %arg9: memref<2x16x32xf32, #tpu.memory_space<vmem>>, %arg10: memref<2x16x32xf32, #tpu.memory_space<vmem>>) attributes {dimension_semantics = [#tpu.dimension_semantics<arbitrary>], iteration_bounds = array<i64: 2>, scalar_prefetch = 0 : i64, scratch_operands = 1 : i64, tpu.core_type = #tpu.core_type<tc>, window_params = [{pipeline_mode = #tpu.pipeline_mode<synchronous>, transform_indices = @transform_0, window_bounds = array<i64: 2, 16, 32>}, {pipeline_mode = #tpu.pipeline_mode<synchronous>, transform_indices = @transform_1, window_bounds = array<i64: 2, 8, 16>}, {transform_indices = @transform_2, window_bounds = array<i64: 1, 32, 32>}, {transform_indices = @transform_3, window_bounds = array<i64: 1, 64, 16>}, {pipeline_mode = #tpu.pipeline_mode<synchronous>, transform_indices = @transform_4, window_bounds = array<i64: 32, 32>}, {pipeline_mode = #tpu.pipeline_mode<synchronous>, transform_indices = @transform_5, window_bounds = array<i64: 1, 32>}, {pipeline_mode = #tpu.pipeline_mode<synchronous>, transform_indices = @transform_6, window_bounds = array<i64: 2, 16, 32>}, {pipeline_mode = #tpu.pipeline_mode<synchronous>, transform_indices = @transform_7, window_bounds = array<i64: 2, 16, 32>}, {pipeline_mode = #tpu.pipeline_mode<synchronous>, transform_indices = @transform_8, window_bounds = array<i64: 2, 16, 32>}]} {
    %c0_i32 = arith.constant 0 : i32
    %0 = arith.cmpi eq, %arg0, %c0_i32 : i32
    %1 = arith.extui %0 : i1 to i32
    %c0_i32_0 = arith.constant 0 : i32
    %2 = arith.cmpi ne, %1, %c0_i32_0 : i32
    scf.if %2 {
      %c0_37 = arith.constant 0 : index
      %c0_38 = arith.constant 0 : index
      %c0_39 = arith.constant 0 : index
      %57 = vector.load %arg1[%c0_37, %c0_38, %c0_39] : memref<2x16x32xf32, #tpu.memory_space<vmem>>, vector<2x16x32xf32>
      %c0_40 = arith.constant 0 : index
      %c0_41 = arith.constant 0 : index
      %c0_42 = arith.constant 0 : index
      %58 = vector.load %arg10[%c0_40, %c0_41, %c0_42] : memref<2x16x32xf32, #tpu.memory_space<vmem>>, vector<2x16x32xf32>
      tpu.vector_store %arg10[%c0_40, %c0_41, %c0_42], %57 {strides = array<i32>} : memref<2x16x32xf32, #tpu.memory_space<vmem>>, vector<2x16x32xf32>,
    } else {
    }
    %c0 = arith.constant 0 : index
    %c0_1 = arith.constant 0 : index
    %c0_2 = arith.constant 0 : index
    %3 = vector.load %arg10[%c0, %c0_1, %c0_2] : memref<2x16x32xf32, #tpu.memory_space<vmem>>, vector<2x16x32xf32>
    %4 = vector.shape_cast %3 : vector<2x16x32xf32> to vector<32x32xf32>
    %c0_3 = arith.constant 0 : index
    %c0_4 = arith.constant 0 : index
    %c0_5 = arith.constant 0 : index
    %5 = vector.load %arg2[%c0_3, %c0_4, %c0_5] : memref<2x8x16xf32, #tpu.memory_space<vmem>>, vector<2x8x16xf32>
    %6 = vector.shape_cast %5 : vector<2x8x16xf32> to vector<16x16xf32>
    %c0_6 = arith.constant 0 : index
    %c0_7 = arith.constant 0 : index
    %c0_8 = arith.constant 0 : index
    %7 = vector.load %arg3[%c0_6, %c0_7, %c0_8] : memref<1x32x32xf32, #tpu.memory_space<vmem>>, vector<1x32x32xf32>
    %8 = vector.shape_cast %7 : vector<1x32x32xf32> to vector<32x32xf32>
    %cst = arith.constant dense<0.000000e+00> : vector<32x32xf32>
    %9 = tpu.matmul %4, %8, %cst {dimension_numbers = #tpu.dot_dimension_numbers<[1], [1], [0], [0], [0, 0, 1, 0], [], []>} : vector<32x32xf32>, vector<32x32xf32>, vector<32x32xf32> -> vector<32x32xf32>
    %c0_9 = arith.constant 0 : index
    %c0_10 = arith.constant 0 : index
    %c0_11 = arith.constant 0 : index
    %10 = vector.load %arg4[%c0_9, %c0_10, %c0_11] : memref<1x64x16xf32, #tpu.memory_space<vmem>>, vector<1x64x16xf32>
    %11 = vector.shape_cast %10 : vector<1x64x16xf32> to vector<64x16xf32>
    %cst_12 = arith.constant dense<0.000000e+00> : vector<16x64xf32>
    %12 = tpu.matmul %6, %11, %cst_12 {dimension_numbers = #tpu.dot_dimension_numbers<[1], [1], [0], [0], [0, 0, 1, 0], [], []>} : vector<16x16xf32>, vector<64x16xf32>, vector<16x64xf32> -> vector<16x64xf32>
    %13 = vector.shape_cast %9 : vector<32x32xf32> to vector<2x16x32xf32>
    %14 = vector.extract_strided_slice %12 {offsets = [0, 0], sizes = [16, 32], strides = [1, 1]} : vector<16x64xf32> to vector<16x32xf32>
    %15 = vector.shape_cast %14 : vector<16x32xf32> to vector<2x8x32xf32>
    %16 = vector.extract_strided_slice %12 {offsets = [0, 32], sizes = [16, 32], strides = [1, 1]} : vector<16x64xf32> to vector<16x32xf32>
    %17 = vector.shape_cast %16 : vector<16x32xf32> to vector<2x8x32xf32>
    "tpu.trace_start"() <{level = 10 : i32, message = "bnd,bmd->bnm"}> : () -> ()
    %cst_13 = arith.constant dense<0.000000e+00> : vector<2x16x8xf32>
    %18 = tpu.matmul %13, %15, %cst_13 {dimension_numbers = #tpu.dot_dimension_numbers<[2], [2], [1], [1], [0, 0, 0, 1, 1, 1], [0], [0]>} : vector<2x16x32xf32>, vector<2x8x32xf32>, vector<2x16x8xf32> -> vector<2x16x8xf32>
    "tpu.trace_stop"() : () -> ()
    %cst_14 = arith.constant 0.176776692 : f32
    %19 = vector.broadcast %cst_14 : f32 to vector<2x16x8xf32>
    %20 = arith.mulf %18, %19 : vector<2x16x8xf32>
    %cst_15 = arith.constant dense<0xFF800000> : vector<2x16xf32>
    %21 = vector.multi_reduction <maximumf>, %20, %cst_15 [2] : vector<2x16x8xf32> to vector<2x16xf32>
    %22 = vector.shape_cast %21 : vector<2x16xf32> to vector<2x16x1xf32>
    %23 = vector.broadcast %22 : vector<2x16x1xf32> to vector<2x16x8xf32>
    %24 = arith.subf %20, %23 : vector<2x16x8xf32>
    %25 = math.exp %24 : vector<2x16x8xf32>
    %cst_16 = arith.constant dense<0.000000e+00> : vector<2x16xf32>
    %26 = vector.multi_reduction <add>, %25, %cst_16 [2] : vector<2x16x8xf32> to vector<2x16xf32>
    %27 = vector.shape_cast %26 : vector<2x16xf32> to vector<2x16x1xf32>
    %28 = tpu.reciprocal %27 {approx = true} : vector<2x16x1xf32> -> vector<2x16x1xf32>
    %29 = vector.broadcast %28 : vector<2x16x1xf32> to vector<2x16x8xf32>
    %30 = arith.mulf %25, %29 : vector<2x16x8xf32>
    "tpu.trace_start"() <{level = 10 : i32, message = "bnm,bmd->bnd"}> : () -> ()
    %cst_17 = arith.constant dense<0.000000e+00> : vector<2x16x32xf32>
    %31 = tpu.matmul %30, %17, %cst_17 {dimension_numbers = #tpu.dot_dimension_numbers<[2], [1], [1], [2], [0, 0, 0, 1, 1, 2], [0], [0]>} : vector<2x16x8xf32>, vector<2x8x32xf32>, vector<2x16x32xf32> -> vector<2x16x32xf32>
    "tpu.trace_stop"() : () -> ()
    %c0_18 = arith.constant 0 : index
    %c0_19 = arith.constant 0 : index
    %c0_20 = arith.constant 0 : index
    %32 = vector.load %arg7[%c0_18, %c0_19, %c0_20] : memref<2x16x32xf32, #tpu.memory_space<vmem>>, vector<1x16x32xf32>
    %33 = vector.shape_cast %32 : vector<1x16x32xf32> to vector<16x32xf32>
    %34 = vector.shape_cast %33 : vector<16x32xf32> to vector<1x16x32xf32>
    %35 = vector.broadcast %34 : vector<1x16x32xf32> to vector<2x16x32xf32>
    %c0_21 = arith.constant 0 : index
    %c0_22 = arith.constant 0 : index
    %c0_23 = arith.constant 0 : index
    %36 = vector.load %arg8[%c0_21, %c0_22, %c0_23] : memref<2x16x32xf32, #tpu.memory_space<vmem>>, vector<1x16x32xf32>
    %37 = vector.shape_cast %36 : vector<1x16x32xf32> to vector<16x32xf32>
    %38 = vector.shape_cast %37 : vector<16x32xf32> to vector<1x16x32xf32>
    %39 = vector.broadcast %38 : vector<1x16x32xf32> to vector<2x16x32xf32>
    "tpu.trace_start"() <{level = 10 : i32, message = "bpc,bsc->bps"}> : () -> ()
    %cst_24 = arith.constant dense<0.000000e+00> : vector<2x16x16xf32>
    %40 = tpu.matmul %35, %31, %cst_24 {dimension_numbers = #tpu.dot_dimension_numbers<[2], [2], [1], [1], [0, 0, 0, 1, 1, 1], [0], [0]>} : vector<2x16x32xf32>, vector<2x16x32xf32>, vector<2x16x16xf32> -> vector<2x16x16xf32>
    "tpu.trace_stop"() : () -> ()
    "tpu.trace_start"() <{level = 10 : i32, message = "bps,bsq->bpq"}> : () -> ()
    %cst_25 = arith.constant dense<0.000000e+00> : vector<2x16x32xf32>
    %41 = tpu.matmul %40, %39, %cst_25 {dimension_numbers = #tpu.dot_dimension_numbers<[2], [1], [1], [2], [0, 0, 0, 1, 1, 2], [0], [0]>} : vector<2x16x16xf32>, vector<2x16x32xf32>, vector<2x16x32xf32> -> vector<2x16x32xf32>
    "tpu.trace_stop"() : () -> ()
    %c1 = arith.constant 1 : index
    %c0_26 = arith.constant 0 : index
    %c0_27 = arith.constant 0 : index
    %42 = vector.load %arg7[%c1, %c0_26, %c0_27] : memref<2x16x32xf32, #tpu.memory_space<vmem>>, vector<1x16x32xf32>
    %43 = vector.shape_cast %42 : vector<1x16x32xf32> to vector<16x32xf32>
    %44 = vector.shape_cast %43 : vector<16x32xf32> to vector<1x16x32xf32>
    %45 = vector.broadcast %44 : vector<1x16x32xf32> to vector<2x16x32xf32>
    %c1_28 = arith.constant 1 : index
    %c0_29 = arith.constant 0 : index
    %c0_30 = arith.constant 0 : index
    %46 = vector.load %arg8[%c1_28, %c0_29, %c0_30] : memref<2x16x32xf32, #tpu.memory_space<vmem>>, vector<1x16x32xf32>
    %47 = vector.shape_cast %46 : vector<1x16x32xf32> to vector<16x32xf32>
    %48 = vector.shape_cast %47 : vector<16x32xf32> to vector<1x16x32xf32>
    %49 = vector.broadcast %48 : vector<1x16x32xf32> to vector<2x16x32xf32>
    "tpu.trace_start"() <{level = 10 : i32, message = "bpc,bsc->bps"}> : () -> ()
    %cst_31 = arith.constant dense<0.000000e+00> : vector<2x16x16xf32>
    %50 = tpu.matmul %45, %31, %cst_31 {dimension_numbers = #tpu.dot_dimension_numbers<[2], [2], [1], [1], [0, 0, 0, 1, 1, 1], [0], [0]>} : vector<2x16x32xf32>, vector<2x16x32xf32>, vector<2x16x16xf32> -> vector<2x16x16xf32>
    "tpu.trace_stop"() : () -> ()
    "tpu.trace_start"() <{level = 10 : i32, message = "bps,bsq->bpq"}> : () -> ()
    %cst_32 = arith.constant dense<0.000000e+00> : vector<2x16x32xf32>
    %51 = tpu.matmul %50, %49, %cst_32 {dimension_numbers = #tpu.dot_dimension_numbers<[2], [1], [1], [2], [0, 0, 0, 1, 1, 2], [0], [0]>} : vector<2x16x16xf32>, vector<2x16x32xf32>, vector<2x16x32xf32> -> vector<2x16x32xf32>
    "tpu.trace_stop"() : () -> ()
    %52 = arith.addf %41, %51 : vector<2x16x32xf32>
    %c0_33 = arith.constant 0 : index
    %c0_34 = arith.constant 0 : index
    %c0_35 = arith.constant 0 : index
    %53 = vector.load %arg10[%c0_33, %c0_34, %c0_35] : memref<2x16x32xf32, #tpu.memory_space<vmem>>, vector<2x16x32xf32>
    tpu.vector_store %arg10[%c0_33, %c0_34, %c0_35], %52 {strides = array<i32>} : memref<2x16x32xf32, #tpu.memory_space<vmem>>, vector<2x16x32xf32>,
    %c1_i32 = arith.constant 1 : i32
    %54 = arith.cmpi eq, %arg0, %c1_i32 : i32
    %55 = arith.extui %54 : i1 to i32
    %c0_i32_36 = arith.constant 0 : i32
    %56 = arith.cmpi ne, %55, %c0_i32_36 : i32
    scf.if %56 {
      %57 = vector.shape_cast %52 : vector<2x16x32xf32> to vector<32x32xf32>
      %c0_37 = arith.constant 0 : index
      %c0_38 = arith.constant 0 : index
      %58 = vector.load %arg5[%c0_37, %c0_38] : memref<32x32xf32, #tpu.memory_space<vmem>>, vector<32x32xf32>
      %cst_39 = arith.constant dense<0.000000e+00> : vector<32x32xf32>
      %59 = tpu.matmul %57, %58, %cst_39 {dimension_numbers = #tpu.dot_dimension_numbers<[1], [1], [0], [0], [0, 0, 1, 0], [], []>} : vector<32x32xf32>, vector<32x32xf32>, vector<32x32xf32> -> vector<32x32xf32>
      %c0_40 = arith.constant 0 : index
      %c0_41 = arith.constant 0 : index
      %60 = vector.load %arg6[%c0_40, %c0_41] : memref<1x32xf32, #tpu.memory_space<vmem>>, vector<1x32xf32>
      %61 = vector.broadcast %60 : vector<1x32xf32> to vector<32x32xf32>
      %62 = arith.addf %59, %61 : vector<32x32xf32>
      %63 = vector.shape_cast %62 : vector<32x32xf32> to vector<2x16x32xf32>
      %c0_42 = arith.constant 0 : index
      %c0_43 = arith.constant 0 : index
      %c0_44 = arith.constant 0 : index
      %64 = vector.load %arg9[%c0_42, %c0_43, %c0_44] : memref<2x16x32xf32, #tpu.memory_space<vmem>>, vector<2x16x32xf32>
      tpu.vector_store %arg9[%c0_42, %c0_43, %c0_44], %63 {strides = array<i32>} : memref<2x16x32xf32, #tpu.memory_space<vmem>>, vector<2x16x32xf32>,
    } else {
    }
    return
  }
  func.func @transform_0(%arg0: i32) -> (i32, i32, i32) {
    %c0_i32 = arith.constant 0 : i32
    %c0_i32_0 = arith.constant 0 : i32
    %c0_i32_1 = arith.constant 0 : i32
    %c0_i32_2 = arith.constant 0 : i32
    return %c0_i32, %c0_i32_0, %c0_i32_1 : i32, i32, i32
  }
  func.func @transform_1(%arg0: i32) -> (i32, i32, i32) {
    %c0_i32 = arith.constant 0 : i32
    %c0_i32_0 = arith.constant 0 : i32
    %c0_i32_1 = arith.constant 0 : i32
    %c0_i32_2 = arith.constant 0 : i32
    return %c0_i32, %c0_i32_0, %c0_i32_1 : i32, i32, i32
  }
  func.func @transform_2(%arg0: i32) -> (i32, i32, i32) {
    %c0_i32 = arith.constant 0 : i32
    %c0_i32_0 = arith.constant 0 : i32
    %c0_i32_1 = arith.constant 0 : i32
    return %arg0, %c0_i32, %c0_i32_0 : i32, i32, i32
  }
  func.func @transform_3(%arg0: i32) -> (i32, i32, i32) {
    %c0_i32 = arith.constant 0 : i32
    %c0_i32_0 = arith.constant 0 : i32
    %c0_i32_1 = arith.constant 0 : i32
    return %arg0, %c0_i32, %c0_i32_0 : i32, i32, i32
  }
  func.func @transform_4(%arg0: i32) -> (i32, i32) {
    %c0_i32 = arith.constant 0 : i32
    %c0_i32_0 = arith.constant 0 : i32
    %c0_i32_1 = arith.constant 0 : i32
    return %c0_i32, %c0_i32_0 : i32, i32
  }
  func.func @transform_5(%arg0: i32) -> (i32, i32) {
    %c0_i32 = arith.constant 0 : i32
    %c0_i32_0 = arith.constant 0 : i32
    %c0_i32_1 = arith.constant 0 : i32
    return %c0_i32, %c0_i32_0 : i32, i32
  }
  func.func @transform_6(%arg0: i32) -> (i32, i32, i32) {
    %c0_i32 = arith.constant 0 : i32
    %c0_i32_0 = arith.constant 0 : i32
    %c0_i32_1 = arith.constant 0 : i32
    %c0_i32_2 = arith.constant 0 : i32
    return %c0_i32, %c0_i32_0, %c0_i32_1 : i32, i32, i32
  }
  func.func @transform_7(%arg0: i32) -> (i32, i32, i32) {
    %c0_i32 = arith.constant 0 : i32
    %c0_i32_0 = arith.constant 0 : i32
    %c0_i32_1 = arith.constant 0 : i32
    %c0_i32_2 = arith.constant 0 : i32
    return %c0_i32, %c0_i32_0, %c0_i32_1 : i32, i32, i32
  }
  func.func @transform_8(%arg0: i32) -> (i32, i32, i32) {
    %c0_i32 = arith.constant 0 : i32
    %c0_i32_0 = arith.constant 0 : i32
    %c0_i32_1 = arith.constant 0 : i32
    %c0_i32_2 = arith.constant 0 : i32
    return %c0_i32, %c0_i32_0, %c0_i32_1 : i32, i32, i32
  }
}

</mosaic_0001>

<llo_original>
// kernel: tpu_custom_call.1
$region0: #{tpu_custom_call.1}
  #allocation0 [shape = 'u32[]', space=smem, size = 0x4, offset = 0x4, fixed_abs, tag = 'smem constant byte address 0x4 - core index']
  #allocation1 [shape = 'u32[144,128]{1,0:T(1,128)}', space=vmem, size = 0x12000, scoped, tag = 'internal scratch']
  #allocation2 [shape = 'f32[2,16,32]{2,1,0:T(8,128)}', space=vmem, size = 0x4000, scoped, tag = 'scratch operand']
  %s0 = inlined_call_operand.vmem [shape: f32[2,16,32], index: 0, kind: input, shape index: {}]
  %s1 = inlined_call_operand.hbm [shape: f32[2,8,16], index: 1, kind: input, shape index: {}]
  %s2 = inlined_call_operand.vmem [shape: f32[2,32,32], index: 2, kind: input, shape index: {}]
  %s3 = inlined_call_operand.vmem [shape: f32[2,64,16], index: 3, kind: input, shape index: {}]
  %s4 = inlined_call_operand.vmem [shape: f32[32,32], index: 4, kind: input, shape index: {}]
  %s5 = inlined_call_operand.vmem [shape: f32[1,32], index: 5, kind: input, shape index: {}]
  %s6 = inlined_call_operand.vmem [shape: f32[2,16,32], index: 6, kind: input, shape index: {}]
  %s7 = inlined_call_operand.hbm [shape: f32[2,16,32], index: 7, kind: input, shape index: {}]
  %s8 = inlined_call_operand.hbm [shape: f32[2,16,32], index: 8, kind: output, shape index: {}]
  %s9 = sld [smem:[#allocation0]]
  $region81: #{tpu_custom_call.1} parent=0
    _
  %s11 = ssub.s32 1, %s9
  %s12 = scalar_select 0, %s11, %s9
  $region1: #{tpu_custom_call.1} parent=0
    #allocation3 [shape = 'u8[8192]{0}', space=vmem, size = 0x2000, scoped, tag = 'input window, operand 1, single buffered']
    #allocation4 [shape = 's32[2]{0}', space=sflag, size = 0x8, scoped, tag = 'scoped memory for tpu_custom_call.1']
    #allocation5 [shape = 's32[2]{0}', space=sflag, size = 0x8, scoped, tag = 'scoped memory for tpu_custom_call.1']
    #allocation6 [shape = 'u8[16384]{0}', space=vmem, size = 0x4000, scoped, tag = 'input window, operand 7, single buffered']
    #allocation7 [shape = 's32[1]{0}', space=sflag, size = 0x4, scoped, tag = 'scoped memory for tpu_custom_call.1']
    #allocation8 [shape = 'u8[16384]{0}', space=vmem, size = 0x4000, scoped, tag = 'output window, operand 0, single buffered']
    %13 = vsyncpa [#allocation4], 0
    %14 = vsyncpa [#allocation7], 0
    %15 = vsyncpa [#allocation5], 0
    loop: start=0, step=1, limit=4
    $region2: #{tpu_custom_call.1} parent=1 // loop_pre_header
      _
    $region3: #{tpu_custom_call.1} parent=1 // loop_header
      %s17 = sphi 0, %s21
      %p18 = scmp.ge.s32.totalorder %s17, 4
      %s25 = sphi 0, %s25
      %s27 = sphi 0, %s25
      %s28 = sphi 0, %s27
      %s42 = sphi 0, %s28
      %s46 = sphi 0, %s46
      %s48 = sphi 0, %s46
      %s49 = sphi 0, %s48
      %s63 = sphi 0, %s49
      %s69 = sphi 0, %s71
      %s72 = sphi 0, %s69
      %s73 = sphi 0, %s72
      %s89 = sphi 0, %s73
      %s95 = sphi 0, %s97
      %s98 = sphi 0, %s95
      %s99 = sphi 0, %s98
      %s115 = sphi 0, %s99
      %s119 = sphi 0, %s119
      %s121 = sphi 0, %s119
      %s122 = sphi 0, %s121
      %s136 = sphi 0, %s122
      %s140 = sphi 0, %s140
      %s142 = sphi 0, %s140
      %s143 = sphi 0, %s142
      %s157 = sphi 0, %s143
      %s161 = sphi 0, %s161
      %s163 = sphi 0, %s161
      %s164 = sphi 0, %s163
      %s178 = sphi 0, %s164
      %s182 = sphi 0, %s182
      %s184 = sphi 0, %s182
      %s185 = sphi 0, %s184
      %s199 = sphi 0, %s185
      %s203 = sphi 0, %s203
      %s205 = sphi 0, %s203
      %s206 = sphi 0, %s205
      %s220 = sphi 0, %s206
    $region4: #{tpu_custom_call.1} parent=1 // loop_header_branch
      %20 = sbr.rel (%p18) target = $region8
    $region5: #{tpu_custom_call.1} parent=1 // loop_body
      %s22 = ssub.s32 %s17, 1
      %s23 = ssub.s32 %s17, 2
      %s24 = sadd.s32 %s17, 1
      %s26 = sadd.s32 %s25, 1
      %p29 = scmp.eq.s32.totalorder %s17, 1
      %p30 = scmp.ne.s32.totalorder %s25, %s27
      %p31 = scmp.eq.s32.totalorder %s17, 0
      %p32 = por %p30, %p31
      %p33 = scmp.ne.s32.totalorder %s25, %s27
      %p34 = scmp.eq.s32.totalorder %s22, 1
      %p35 = por %p33, %p34
      %p36 = scmp.ne.s32.totalorder %s27, %s28
      %p37 = scmp.eq.s32.totalorder %s22, 0
      %p38 = por %p36, %p37
      %p39 = scmp.ne.s32.totalorder %s27, %s28
      %p40 = scmp.eq.s32.totalorder %s23, 1
      %p41 = por %p39, %p40
      %p43 = scmp.ne.s32.totalorder %s28, %s42
      %p44 = scmp.eq.s32.totalorder %s23, 0
      %p45 = por %p43, %p44
      %s47 = sadd.s32 %s46, 1
      %p50 = scmp.eq.s32.totalorder %s17, 1
      %p51 = scmp.ne.s32.totalorder %s46, %s48
      %p52 = scmp.eq.s32.totalorder %s17, 0
      %p53 = por %p51, %p52
      %p54 = scmp.ne.s32.totalorder %s46, %s48
      %p55 = scmp.eq.s32.totalorder %s22, 1
      %p56 = por %p54, %p55
      %p57 = scmp.ne.s32.totalorder %s48, %s49
      %p58 = scmp.eq.s32.totalorder %s22, 0
      %p59 = por %p57, %p58
      %p60 = scmp.ne.s32.totalorder %s48, %s49
      %p61 = scmp.eq.s32.totalorder %s23, 1
      %p62 = por %p60, %p61
      %p64 = scmp.ne.s32.totalorder %s49, %s63
      %p65 = scmp.eq.s32.totalorder %s23, 0
      %p66 = por %p64, %p65
      %s67 = ssub.s32 %s17, %s24
      %p68 = scmp.eq.s32.totalorder %s67, 0
      %s70 = sadd.s32 %s69, 1
      %s71 = scalar_select %p68, %s69, %s70
      %p74 = pneg %p68
      %p75 = scmp.eq.s32.totalorder %s17, 1
      %p76 = por %p74, %p75
      %p77 = scmp.ne.s32.totalorder %s69, %s72
      %p78 = scmp.eq.s32.totalorder %s17, 0
      %p79 = por %p77, %p78
      %p80 = scmp.ne.s32.totalorder %s69, %s72
      %p81 = scmp.eq.s32.totalorder %s22, 1
      %p82 = por %p80, %p81
      %p83 = scmp.ne.s32.totalorder %s72, %s73
      %p84 = scmp.eq.s32.totalorder %s22, 0
      %p85 = por %p83, %p84
      %p86 = scmp.ne.s32.totalorder %s72, %s73
      %p87 = scmp.eq.s32.totalorder %s23, 1
      %p88 = por %p86, %p87
      %p90 = scmp.ne.s32.totalorder %s73, %s89
      %p91 = scmp.eq.s32.totalorder %s23, 0
      %p92 = por %p90, %p91
      %s93 = ssub.s32 %s17, %s24
      %p94 = scmp.eq.s32.totalorder %s93, 0
      %s96 = sadd.s32 %s95, 1
      %s97 = scalar_select %p94, %s95, %s96
      %p100 = pneg %p94
      %p101 = scmp.eq.s32.totalorder %s17, 1
      %p102 = por %p100, %p101
      %p103 = scmp.ne.s32.totalorder %s95, %s98
      %p104 = scmp.eq.s32.totalorder %s17, 0
      %p105 = por %p103, %p104
      %p106 = scmp.ne.s32.totalorder %s95, %s98
      %p107 = scmp.eq.s32.totalorder %s22, 1
      %p108 = por %p106, %p107
      %p109 = scmp.ne.s32.totalorder %s98, %s99
      %p110 = scmp.eq.s32.totalorder %s22, 0
      %p111 = por %p109, %p110
      %p112 = scmp.ne.s32.totalorder %s98, %s99
      %p113 = scmp.eq.s32.totalorder %s23, 1
      %p114 = por %p112, %p113
      %p116 = scmp.ne.s32.totalorder %s99, %s115
      %p117 = scmp.eq.s32.totalorder %s23, 0
      %p118 = por %p116, %p117
      %s120 = sadd.s32 %s119, 1
      %p123 = scmp.eq.s32.totalorder %s17, 1
      %p124 = scmp.ne.s32.totalorder %s119, %s121
      %p125 = scmp.eq.s32.totalorder %s17, 0
      %p126 = por %p124, %p125
      %p127 = scmp.ne.s32.totalorder %s119, %s121
      %p128 = scmp.eq.s32.totalorder %s22, 1
      %p129 = por %p127, %p128
      %p130 = scmp.ne.s32.totalorder %s121, %s122
      %p131 = scmp.eq.s32.totalorder %s22, 0
      %p132 = por %p130, %p131
      %p133 = scmp.ne.s32.totalorder %s121, %s122
      %p134 = scmp.eq.s32.totalorder %s23, 1
      %p135 = por %p133, %p134
      %p137 = scmp.ne.s32.totalorder %s122, %s136
      %p138 = scmp.eq.s32.totalorder %s23, 0
      %p139 = por %p137, %p138
      %s141 = sadd.s32 %s140, 1
      %p144 = scmp.eq.s32.totalorder %s17, 1
      %p145 = scmp.ne.s32.totalorder %s140, %s142
      %p146 = scmp.eq.s32.totalorder %s17, 0
      %p147 = por %p145, %p146
      %p148 = scmp.ne.s32.totalorder %s140, %s142
      %p149 = scmp.eq.s32.totalorder %s22, 1
      %p150 = por %p148, %p149
      %p151 = scmp.ne.s32.totalorder %s142, %s143
      %p152 = scmp.eq.s32.totalorder %s22, 0
      %p153 = por %p151, %p152
      %p154 = scmp.ne.s32.totalorder %s142, %s143
      %p155 = scmp.eq.s32.totalorder %s23, 1
      %p156 = por %p154, %p155
      %p158 = scmp.ne.s32.totalorder %s143, %s157
      %p159 = scmp.eq.s32.totalorder %s23, 0
      %p160 = por %p158, %p159
      %s162 = sadd.s32 %s161, 1
      %p165 = scmp.eq.s32.totalorder %s17, 1
      %p166 = scmp.ne.s32.totalorder %s161, %s163
      %p167 = scmp.eq.s32.totalorder %s17, 0
      %p168 = por %p166, %p167
      %p169 = scmp.ne.s32.totalorder %s161, %s163
      %p170 = scmp.eq.s32.totalorder %s22, 1
      %p171 = por %p169, %p170
      %p172 = scmp.ne.s32.totalorder %s163, %s164
      %p173 = scmp.eq.s32.totalorder %s22, 0
      %p174 = por %p172, %p173
      %p175 = scmp.ne.s32.totalorder %s163, %s164
      %p176 = scmp.eq.s32.totalorder %s23, 1
      %p177 = por %p175, %p176
      %p179 = scmp.ne.s32.totalorder %s164, %s178
      %p180 = scmp.eq.s32.totalorder %s23, 0
      %p181 = por %p179, %p180
      %s183 = sadd.s32 %s182, 1
      %p186 = scmp.eq.s32.totalorder %s17, 1
      %p187 = scmp.ne.s32.totalorder %s182, %s184
      %p188 = scmp.eq.s32.totalorder %s17, 0
      %p189 = por %p187, %p188
      %p190 = scmp.ne.s32.totalorder %s182, %s184
      %p191 = scmp.eq.s32.totalorder %s22, 1
      %p192 = por %p190, %p191
      %p193 = scmp.ne.s32.totalorder %s184, %s185
      %p194 = scmp.eq.s32.totalorder %s22, 0
      %p195 = por %p193, %p194
      %p196 = scmp.ne.s32.totalorder %s184, %s185
      %p197 = scmp.eq.s32.totalorder %s23, 1
      %p198 = por %p196, %p197
      %p200 = scmp.ne.s32.totalorder %s185, %s199
      %p201 = scmp.eq.s32.totalorder %s23, 0
      %p202 = por %p200, %p201
      %s204 = sadd.s32 %s203, 1
      %p207 = scmp.eq.s32.totalorder %s17, 1
      %p208 = scmp.ne.s32.totalorder %s203, %s205
      %p209 = scmp.eq.s32.totalorder %s17, 0
      %p210 = por %p208, %p209
      %p211 = scmp.ne.s32.totalorder %s203, %s205
      %p212 = scmp.eq.s32.totalorder %s22, 1
      %p213 = por %p211, %p212
      %p214 = scmp.ne.s32.totalorder %s205, %s206
      %p215 = scmp.eq.s32.totalorder %s22, 0
      %p216 = por %p214, %p215
      %p217 = scmp.ne.s32.totalorder %s205, %s206
      %p218 = scmp.eq.s32.totalorder %s23, 1
      %p219 = por %p217, %p218
      %p221 = scmp.ne.s32.totalorder %s206, %s220
      %p222 = scmp.eq.s32.totalorder %s23, 0
      %p223 = por %p221, %p222
      %p224 = scmp.le.s32.totalorder 1, %s17
      %p225 = scmp.lt.s32.totalorder %s17, 3
      %p226 = pnand %p224, %p225
      %p227 = pneg %p226
      // Predicated region
      $region9: #{tpu_custom_call.1} parent=5 // pred_check
        _
      $region10: #{tpu_custom_call.1} parent=5 // pred_check_branch
        %229 = sbr.rel (%p226) target = $region12
      $region11: #{tpu_custom_call.1} parent=5 // pred_region
        %s230 = ssub.s32 %s17, 1
        // Predicated region
        $region13: #{tpu_custom_call.1} parent=11 // pred_check
          %p231 = pneg %p38
        $region14: #{tpu_custom_call.1} parent=11 // pred_check_branch
          %233 = sbr.rel (%p231) target = $region16
        $region15: #{tpu_custom_call.1} parent=11 // pred_region
          _
        $region16: #{tpu_custom_call.1} parent=11 // pred_fallthru
          _
        // Predicated region
        $region17: #{tpu_custom_call.1} parent=11 // pred_check
          %p234 = pneg %p59
        $region18: #{tpu_custom_call.1} parent=11 // pred_check_branch
          %236 = sbr.rel (%p234) target = $region20
        $region19: #{tpu_custom_call.1} parent=11 // pred_region
          %s238 = ssub.s32 256, 256
          %239 = vsyncadd [#allocation4], %s238
          %s240 = sshll.u32 [#allocation3], 4
          %s241 = int_to_ptr.vmem [resolvable:$true] %s240
          %246 = dma.hbm_to_vmem [thread:$0]  %s1, 256, %s241, [#allocation4], 128, 128, 8
        $region20: #{tpu_custom_call.1} parent=11 // pred_fallthru
          _
        // Predicated region
        $region21: #{tpu_custom_call.1} parent=11 // pred_check
          %p247 = pneg %p132
        $region22: #{tpu_custom_call.1} parent=11 // pred_check_branch
          %249 = sbr.rel (%p247) target = $region24
        $region23: #{tpu_custom_call.1} parent=11 // pred_region
          _
        $region24: #{tpu_custom_call.1} parent=11 // pred_fallthru
          _
        // Predicated region
        $region25: #{tpu_custom_call.1} parent=11 // pred_check
          %p250 = pneg %p153
        $region26: #{tpu_custom_call.1} parent=11 // pred_check_branch
          %252 = sbr.rel (%p250) target = $region28
        $region27: #{tpu_custom_call.1} parent=11 // pred_region
          _
        $region28: #{tpu_custom_call.1} parent=11 // pred_fallthru
          _
        // Predicated region
        $region29: #{tpu_custom_call.1} parent=11 // pred_check
          %p253 = pneg %p174
        $region30: #{tpu_custom_call.1} parent=11 // pred_check_branch
          %255 = sbr.rel (%p253) target = $region32
        $region31: #{tpu_custom_call.1} parent=11 // pred_region
          _
        $region32: #{tpu_custom_call.1} parent=11 // pred_fallthru
          _
        // Predicated region
        $region33: #{tpu_custom_call.1} parent=11 // pred_check
          %p256 = pneg %p195
        $region34: #{tpu_custom_call.1} parent=11 // pred_check_branch
          %258 = sbr.rel (%p256) target = $region36
        $region35: #{tpu_custom_call.1} parent=11 // pred_region
          %s260 = ssub.s32 512, 512
          %261 = vsyncadd [#allocation7], %s260
          %s262 = sshll.u32 [#allocation6], 4
          %s263 = int_to_ptr.vmem [resolvable:$true] %s262
          %268 = dma.hbm_to_vmem [thread:$0]  %s7, 512, %s263, [#allocation7], 128, 128, 8
        $region36: #{tpu_custom_call.1} parent=11 // pred_fallthru
          _
      $region12: #{tpu_custom_call.1} parent=5 // pred_fallthru
        _
      %p269 = scmp.lt.s32.totalorder %s17, 2
      // Predicated region
      $region37: #{tpu_custom_call.1} parent=5 // pred_check
        %p270 = pneg %p269
      $region38: #{tpu_custom_call.1} parent=5 // pred_check_branch
        %272 = sbr.rel (%p270) target = $region40
      $region39: #{tpu_custom_call.1} parent=5 // pred_region
        // Predicated region
        $region41: #{tpu_custom_call.1} parent=39 // pred_check
          %p273 = pneg %p79
        $region42: #{tpu_custom_call.1} parent=39 // pred_check_branch
          %275 = sbr.rel (%p273) target = $region44
        $region43: #{tpu_custom_call.1} parent=39 // pred_region
          %p276 = scmp.lt.s32.totalorder %s17, 1
          %s277 = scalar_select %p276, %s17, 1
          %s278 = smul.addr %s277, 4
          %s279 = smul.addr %s278, 8
          %s280 = scalar_lea.vmem %s2, %s279
        $region44: #{tpu_custom_call.1} parent=39 // pred_fallthru
          _
        // Predicated region
        $region45: #{tpu_custom_call.1} parent=39 // pred_check
          %p281 = pneg %p105
        $region46: #{tpu_custom_call.1} parent=39 // pred_check_branch
          %283 = sbr.rel (%p281) target = $region48
        $region47: #{tpu_custom_call.1} parent=39 // pred_region
          %p284 = scmp.lt.s32.totalorder %s17, 1
          %s285 = scalar_select %p284, %s17, 1
          %s286 = smul.addr %s285, 8
          %s287 = smul.addr %s286, 8
          %s288 = scalar_lea.vmem %s3, %s287
        $region48: #{tpu_custom_call.1} parent=39 // pred_fallthru
          _
      $region40: #{tpu_custom_call.1} parent=5 // pred_fallthru
        _
      %p289 = scmp.le.s32.totalorder 1, %s17
      %p290 = scmp.lt.s32.totalorder %s17, 3
      %p291 = pnand %p289, %p290
      %p292 = pneg %p291
      // Predicated region
      $region49: #{tpu_custom_call.1} parent=5 // pred_check
        _
      $region50: #{tpu_custom_call.1} parent=5 // pred_check_branch
        %294 = sbr.rel (%p291) target = $region52
      $region51: #{tpu_custom_call.1} parent=5 // pred_region
        %s295 = ssub.s32 %s17, 1
        // Predicated region
        $region53: #{tpu_custom_call.1} parent=51 // pred_check
          %p296 = pneg %p59
        $region54: #{tpu_custom_call.1} parent=51 // pred_check_branch
          %298 = sbr.rel (%p296) target = $region56
        $region55: #{tpu_custom_call.1} parent=51 // pred_region
          %299 = dma.done [#allocation4], 256
        $region56: #{tpu_custom_call.1} parent=51 // pred_fallthru
          _
        // Predicated region
        $region57: #{tpu_custom_call.1} parent=51 // pred_check
          %p300 = pneg %p195
        $region58: #{tpu_custom_call.1} parent=51 // pred_check_branch
          %302 = sbr.rel (%p300) target = $region60
        $region59: #{tpu_custom_call.1} parent=51 // pred_region
          %303 = dma.done [#allocation7], 512
        $region60: #{tpu_custom_call.1} parent=51 // pred_fallthru
          _
        %p304 = pneg %p38
        %p305 = pneg %p35
        %p306 = pneg %p59
        %p307 = pneg %p56
        %p308 = scmp.lt.s32.totalorder %s22, 1
        %s309 = scalar_select %p308, %s22, 1
        %s310 = smul.addr %s309, 4
        %s311 = smul.addr %s310, 8
        %s312 = scalar_lea.vmem %s2, %s311
        %p313 = pneg %p85
        %p314 = pneg %p82
        %p315 = scmp.lt.s32.totalorder %s22, 1
        %s316 = scalar_select %p315, %s22, 1
        %s317 = smul.addr %s316, 8
        %s318 = smul.addr %s317, 8
        %s319 = scalar_lea.vmem %s3, %s318
        %p320 = pneg %p111
        %p321 = pneg %p108
        %p322 = pneg %p132
        %p323 = pneg %p129
        %p324 = pneg %p153
        %p325 = pneg %p150
        %p326 = pneg %p174
        %p327 = pneg %p171
        %p328 = pneg %p195
        %p329 = pneg %p192
        %p330 = pneg %p216
        %p331 = pneg %p213
        %p332 = scmp.lt.s32.totalorder %s22, 1
        %s333 = scalar_select %p332, %s22, 1
        %s334 = smul.addr %s333, 4
        %s335 = smul.addr %s334, 8
        %s336 = scalar_lea.vmem %s2, %s335
        %p337 = scmp.lt.s32.totalorder %s22, 1
        %s338 = scalar_select %p337, %s22, 1
        %s339 = smul.addr %s338, 8
        %s340 = smul.addr %s339, 8
        %s341 = scalar_lea.vmem %s3, %s340
        %p342 = scmp.eq.s32.totalorder %s22, 0
        // Predicated region
        $region61: #{tpu_custom_call.1} parent=51 // pred_check
          %p343 = pneg %p342
        $region62: #{tpu_custom_call.1} parent=51 // pred_check_branch
          %345 = sbr.rel (%p343) target = $region64
        $region63: #{tpu_custom_call.1} parent=51 // pred_region
          %v346 = vld [vmem:[%s0] sm:$0xff]
          %v347 = vld [vmem:[%s0 + $0x8] sm:$0xff]
          %v348 = vld [vmem:[%s0 + $0x10] sm:$0xff]
          %v349 = vld [vmem:[%s0 + $0x18] sm:$0xff]
          %vm350 = vcmask 261120
          %351 = vst.msk [vmem:[#allocation2] sm:$0xff] %vm350, %v346
          %352 = vst.msk [vmem:[#allocation2 + $0x8] sm:$0xff] %vm350, %v347
          %353 = vst.msk [vmem:[#allocation2 + $0x10] sm:$0xff] %vm350, %v348
          %354 = vst.msk [vmem:[#allocation2 + $0x18] sm:$0xff] %vm350, %v349
        $region64: #{tpu_custom_call.1} parent=51 // pred_fallthru
          _
        %v355 = vld [vmem:[#allocation2] sm:$0xff]
        %v356 = vld [vmem:[#allocation2 + $0x8] sm:$0xff]
        %v357 = vld [vmem:[#allocation2 + $0x10] sm:$0xff]
        %v358 = vld [vmem:[#allocation2 + $0x18] sm:$0xff]
        %v359 = vld [vmem:[#allocation3] sm:$0xff]
        %v360 = vld [vmem:[#allocation3 + $0x8] sm:$0xff]
        %v361 = vld [vmem:[%s336] sm:$0xff]
        %v362 = vld [vmem:[%s336 + $0x8] sm:$0xff]
        %v363 = vld [vmem:[%s336 + $0x10] sm:$0xff]
        %v364 = vld [vmem:[%s336 + $0x18] sm:$0xff]
        %vm365 = vcmask 261120
        %v367 = vsel %vm365, %v355, 0
        %v370 = vsel %vm365, %v356, 0
        %v373 = vsel %vm365, %v357, 0
        %v376 = vsel %vm365, %v358, 0
        %v379 = vsel %vm365, %v361, 0
        %v382 = vsel %vm365, %v362, 0
        %v385 = vsel %vm365, %v363, 0
        %v388 = vsel %vm365, %v364, 0
        %390 = vmatprep.subr.mxu0 0.0
        %391 = vmatpush1.xpose.msra.mxu0 0.0
        %392 = vmatprep.subr.mxu0 0.0
        %393 = vmatpush1.xpose.msra.mxu0 0.0
        %394 = vmatprep.subr.mxu0 0.0
        %395 = vmatpush1.xpose.msra.mxu0 0.0
        %396 = vmatprep.subr.mxu0 0.0
        %397 = vmatpush1.xpose.msra.mxu0 0.0
        %398 = vmatprep.subr.mxu0 0.0
        %399 = vmatpush1.xpose.msra.mxu0 0.0
        %400 = vmatprep.subr.mxu0 0.0
        %401 = vmatpush1.xpose.msra.mxu0 0.0
        %402 = vmatprep.subr.mxu0 0.0
        %403 = vmatpush1.xpose.msra.mxu0 0.0
        %404 = vmatprep.subr.mxu0 0.0
        %405 = vmatpush1.xpose.msra.mxu0 0.0
        %406 = vmatprep.subr.mxu0 0.0
        %407 = vmatpush1.xpose.msra.mxu0 0.0
        %408 = vmatprep.subr.mxu0 0.0
        %409 = vmatpush1.xpose.msra.mxu0 0.0
        %410 = vmatprep.subr.mxu0 0.0
        %411 = vmatpush1.xpose.msra.mxu0 0.0
        %412 = vmatprep.subr.mxu0 0.0
        %413 = vmatpush1.xpose.msra.mxu0 0.0
        %414 = vmatprep.subr.mxu0 0.0
        %415 = vmatpush1.xpose.msra.mxu0 %v388
        %416 = vmatprep.subr.mxu0 0.0
        %417 = vmatpush1.xpose.msra.mxu0 %v385
        %418 = vmatprep.subr.mxu0 0.0
        %419 = vmatpush1.xpose.msra.mxu0 %v382
        %420 = vmatprep.subr.mxu0 0.0
        %421 = vmatpush1.xpose.msra.mxu0 %v379
        %422 = vmatprep.subr.mxu0 0.0
        %423 = vmatpush2.xpose.msra.mxu0 0.0
        %424 = vmatprep.subr.mxu0 0.0
        %425 = vmatpush2.xpose.msra.mxu0 0.0
        %426 = vmatprep.subr.mxu0 0.0
        %427 = vmatpush2.xpose.msra.mxu0 0.0
        %428 = vmatprep.subr.mxu0 0.0
        %429 = vmatpush2.xpose.msra.mxu0 0.0
        %430 = vmatprep.subr.mxu0 0.0
        %431 = vmatpush2.xpose.msra.mxu0 0.0
        %432 = vmatprep.subr.mxu0 0.0
        %433 = vmatpush2.xpose.msra.mxu0 0.0
        %434 = vmatprep.subr.mxu0 0.0
        %435 = vmatpush2.xpose.msra.mxu0 0.0
        %436 = vmatprep.subr.mxu0 0.0
        %437 = vmatpush2.xpose.msra.mxu0 0.0
        %438 = vmatprep.subr.mxu0 0.0
        %439 = vmatpush2.xpose.msra.mxu0 0.0
        %440 = vmatprep.subr.mxu0 0.0
        %441 = vmatpush2.xpose.msra.mxu0 0.0
        %442 = vmatprep.subr.mxu0 0.0
        %443 = vmatpush2.xpose.msra.mxu0 0.0
        %444 = vmatprep.subr.mxu0 0.0
        %445 = vmatpush2.xpose.msra.mxu0 0.0
        %446 = vmatprep.subr.mxu0 0.0
        %447 = vmatpush2.xpose.msra.mxu0 0.0
        %448 = vmatprep.subr.mxu0 0.0
        %449 = vmatpush2.xpose.msra.mxu0 0.0
        %450 = vmatprep.subr.mxu0 0.0
        %451 = vmatpush2.xpose.msra.mxu0 0.0
        %452 = vmatprep.subr.mxu0 0.0
        %453 = vmatpush2.xpose.msra.mxu0 0.0
        %454 = vmatprep.mubr.f32.mxu0 0.0
        %455 = vmatmul.mubr.f32.gmra.mxu0 %v367
        %v456 = vpop.f32.mrf.mxu0
        %v457 = vadd.f32 0.0, %v456
        %v458 = vpop.f32.mrf.mxu0
        %459 = vmatprep.mubr.f32.mxu0 0.0
        %460 = vmatmul.mubr.f32.gmra.mxu0 %v370
        %v461 = vpop.f32.mrf.mxu0
        %v462 = vadd.f32 0.0, %v461
        %v463 = vpop.f32.mrf.mxu0
        %464 = vmatprep.mubr.f32.mxu0 0.0
        %465 = vmatmul.mubr.f32.gmra.mxu0 %v373
        %v466 = vpop.f32.mrf.mxu0
        %v467 = vadd.f32 0.0, %v466
        %v468 = vpop.f32.mrf.mxu0
        %469 = vmatprep.mubr.f32.mxu0 0.0
        %470 = vmatmul.mubr.f32.gmra.mxu0 %v376
        %v471 = vpop.f32.mrf.mxu0
        %v472 = vadd.f32 0.0, %v471
        %v473 = vpop.f32.mrf.mxu0
        %474 = vdwg.mxu0
        %v475 = vld [vmem:[%s341] sm:$0xff]
        %v476 = vld [vmem:[%s341 + $0x8] sm:$0xff]
        %v477 = vld [vmem:[%s341 + $0x10] sm:$0xff]
        %v478 = vld [vmem:[%s341 + $0x18] sm:$0xff]
        %v479 = vld [vmem:[%s341 + $0x20] sm:$0xff]
        %v480 = vld [vmem:[%s341 + $0x28] sm:$0xff]
        %v481 = vld [vmem:[%s341 + $0x30] sm:$0xff]
        %v482 = vld [vmem:[%s341 + $0x38] sm:$0xff]
        %vm483 = vcmask 130048
        %v485 = vsel %vm483, %v359, 0
        %v488 = vsel %vm483, %v360, 0
        %v491 = vsel %vm483, %v475, 0
        %v494 = vsel %vm483, %v476, 0
        %v497 = vsel %vm483, %v477, 0
        %v500 = vsel %vm483, %v478, 0
        %v503 = vsel %vm483, %v479, 0
        %v506 = vsel %vm483, %v480, 0
        %v509 = vsel %vm483, %v481, 0
        %v512 = vsel %vm483, %v482, 0
        %514 = vmatprep.subr.mxu0 0.0
        %515 = vmatpush1.xpose.msra.mxu0 0.0
        %516 = vmatprep.subr.mxu0 0.0
        %517 = vmatpush1.xpose.msra.mxu0 0.0
        %518 = vmatprep.subr.mxu0 0.0
        %519 = vmatpush1.xpose.msra.mxu0 0.0
        %520 = vmatprep.subr.mxu0 0.0
        %521 = vmatpush1.xpose.msra.mxu0 0.0
        %522 = vmatprep.subr.mxu0 0.0
        %523 = vmatpush1.xpose.msra.mxu0 0.0
        %524 = vmatprep.subr.mxu0 0.0
        %525 = vmatpush1.xpose.msra.mxu0 0.0
        %526 = vmatprep.subr.mxu0 0.0
        %527 = vmatpush1.xpose.msra.mxu0 0.0
        %528 = vmatprep.subr.mxu0 0.0
        %529 = vmatpush1.xpose.msra.mxu0 0.0
        %530 = vmatprep.subr.mxu0 0.0
        %531 = vmatpush1.xpose.msra.mxu0 %v512
        %532 = vmatprep.subr.mxu0 0.0
        %533 = vmatpush1.xpose.msra.mxu0 %v509
        %534 = vmatprep.subr.mxu0 0.0
        %535 = vmatpush1.xpose.msra.mxu0 %v506
        %536 = vmatprep.subr.mxu0 0.0
        %537 = vmatpush1.xpose.msra.mxu0 %v503
        %538 = vmatprep.subr.mxu0 0.0
        %539 = vmatpush1.xpose.msra.mxu0 %v500
        %540 = vmatprep.subr.mxu0 0.0
        %541 = vmatpush1.xpose.msra.mxu0 %v497
        %542 = vmatprep.subr.mxu0 0.0
        %543 = vmatpush1.xpose.msra.mxu0 %v494
        %544 = vmatprep.subr.mxu0 0.0
        %545 = vmatpush1.xpose.msra.mxu0 %v491
        %546 = vmatprep.subr.mxu0 0.0
        %547 = vmatpush2.xpose.msra.mxu0 0.0
        %548 = vmatprep.subr.mxu0 0.0
        %549 = vmatpush2.xpose.msra.mxu0 0.0
        %550 = vmatprep.subr.mxu0 0.0
        %551 = vmatpush2.xpose.msra.mxu0 0.0
        %552 = vmatprep.subr.mxu0 0.0
        %553 = vmatpush2.xpose.msra.mxu0 0.0
        %554 = vmatprep.subr.mxu0 0.0
        %555 = vmatpush2.xpose.msra.mxu0 0.0
        %556 = vmatprep.subr.mxu0 0.0
        %557 = vmatpush2.xpose.msra.mxu0 0.0
        %558 = vmatprep.subr.mxu0 0.0
        %559 = vmatpush2.xpose.msra.mxu0 0.0
        %560 = vmatprep.subr.mxu0 0.0
        %561 = vmatpush2.xpose.msra.mxu0 0.0
        %562 = vmatprep.subr.mxu0 0.0
        %563 = vmatpush2.xpose.msra.mxu0 0.0
        %564 = vmatprep.subr.mxu0 0.0
        %565 = vmatpush2.xpose.msra.mxu0 0.0
        %566 = vmatprep.subr.mxu0 0.0
        %567 = vmatpush2.xpose.msra.mxu0 0.0
        %568 = vmatprep.subr.mxu0 0.0
        %569 = vmatpush2.xpose.msra.mxu0 0.0
        %570 = vmatprep.subr.mxu0 0.0
        %571 = vmatpush2.xpose.msra.mxu0 0.0
        %572 = vmatprep.subr.mxu0 0.0
        %573 = vmatpush2.xpose.msra.mxu0 0.0
        %574 = vmatprep.subr.mxu0 0.0
        %575 = vmatpush2.xpose.msra.mxu0 0.0
        %576 = vmatprep.subr.mxu0 0.0
        %577 = vmatpush2.xpose.msra.mxu0 0.0
        %578 = vmatprep.mubr.f32.mxu0 0.0
        %579 = vmatmul.mubr.f32.gmra.mxu0 %v485
        %v580 = vpop.f32.mrf.mxu0
        %v581 = vadd.f32 0.0, %v580
        %v582 = vpop.f32.mrf.mxu0
        %583 = vmatprep.mubr.f32.mxu0 0.0
        %584 = vmatmul.mubr.f32.gmra.mxu0 %v488
        %v585 = vpop.f32.mrf.mxu0
        %v586 = vadd.f32 0.0, %v585
        %v587 = vpop.f32.mrf.mxu0
        %588 = vdwg.mxu0
        %v590 = vsel %vm365, %v457, 0
        %v593 = vsel %vm365, %v462, 0
        %v596 = vsel %vm365, %v581, 0
        %598 = vmatprep.subr.mxu0 0.0
        %599 = vmatpush1.xpose.msra.mxu0 0.0
        %600 = vmatprep.subr.mxu0 0.0
        %601 = vmatpush1.xpose.msra.mxu0 0.0
        %602 = vmatprep.subr.mxu0 0.0
        %603 = vmatpush1.xpose.msra.mxu0 0.0
        %604 = vmatprep.subr.mxu0 0.0
        %605 = vmatpush1.xpose.msra.mxu0 0.0
        %606 = vmatprep.subr.mxu0 0.0
        %607 = vmatpush1.xpose.msra.mxu0 0.0
        %608 = vmatprep.subr.mxu0 0.0
        %609 = vmatpush1.xpose.msra.mxu0 0.0
        %610 = vmatprep.subr.mxu0 0.0
        %611 = vmatpush1.xpose.msra.mxu0 0.0
        %612 = vmatprep.subr.mxu0 0.0
        %613 = vmatpush1.xpose.msra.mxu0 0.0
        %614 = vmatprep.subr.mxu0 0.0
        %615 = vmatpush1.xpose.msra.mxu0 0.0
        %616 = vmatprep.subr.mxu0 0.0
        %617 = vmatpush1.xpose.msra.mxu0 0.0
        %618 = vmatprep.subr.mxu0 0.0
        %619 = vmatpush1.xpose.msra.mxu0 0.0
        %620 = vmatprep.subr.mxu0 0.0
        %621 = vmatpush1.xpose.msra.mxu0 0.0
        %622 = vmatprep.subr.mxu0 0.0
        %623 = vmatpush1.xpose.msra.mxu0 0.0
        %624 = vmatprep.subr.mxu0 0.0
        %625 = vmatpush1.xpose.msra.mxu0 0.0
        %626 = vmatprep.subr.mxu0 0.0
        %627 = vmatpush1.xpose.msra.mxu0 0.0
        %628 = vmatprep.subr.mxu0 0.0
        %629 = vmatpush1.xpose.msra.mxu0 %v596
        %630 = vmatprep.subr.mxu0 0.0
        %631 = vmatpush2.xpose.msra.mxu0 0.0
        %632 = vmatprep.subr.mxu0 0.0
        %633 = vmatpush2.xpose.msra.mxu0 0.0
        %634 = vmatprep.subr.mxu0 0.0
        %635 = vmatpush2.xpose.msra.mxu0 0.0
        %636 = vmatprep.subr.mxu0 0.0
        %637 = vmatpush2.xpose.msra.mxu0 0.0
        %638 = vmatprep.subr.mxu0 0.0
        %639 = vmatpush2.xpose.msra.mxu0 0.0
        %640 = vmatprep.subr.mxu0 0.0
        %641 = vmatpush2.xpose.msra.mxu0 0.0
        %642 = vmatprep.subr.mxu0 0.0
        %643 = vmatpush2.xpose.msra.mxu0 0.0
        %644 = vmatprep.subr.mxu0 0.0
        %645 = vmatpush2.xpose.msra.mxu0 0.0
        %646 = vmatprep.subr.mxu0 0.0
        %647 = vmatpush2.xpose.msra.mxu0 0.0
        %648 = vmatprep.subr.mxu0 0.0
        %649 = vmatpush2.xpose.msra.mxu0 0.0
        %650 = vmatprep.subr.mxu0 0.0
        %651 = vmatpush2.xpose.msra.mxu0 0.0
        %652 = vmatprep.subr.mxu0 0.0
        %653 = vmatpush2.xpose.msra.mxu0 0.0
        %654 = vmatprep.subr.mxu0 0.0
        %655 = vmatpush2.xpose.msra.mxu0 0.0
        %656 = vmatprep.subr.mxu0 0.0
        %657 = vmatpush2.xpose.msra.mxu0 0.0
        %658 = vmatprep.subr.mxu0 0.0
        %659 = vmatpush2.xpose.msra.mxu0 0.0
        %660 = vmatprep.subr.mxu0 0.0
        %661 = vmatpush2.xpose.msra.mxu0 0.0
        %662 = vmatprep.mubr.f32.mxu0 0.0
        %663 = vmatmul.mubr.f32.gmra.mxu0 %v590
        %v664 = vpop.f32.mrf.mxu0
        %v665 = vadd.f32 0.0, %v664
        %v666 = vpop.f32.mrf.mxu0
        %667 = vmatprep.mubr.f32.mxu0 0.0
        %668 = vmatmul.mubr.f32.gmra.mxu0 %v593
        %v669 = vpop.f32.mrf.mxu0
        %v670 = vadd.f32 0.0, %v669
        %v671 = vpop.f32.mrf.mxu0
        %672 = vdwg.mxu0
        %v674 = vsel %vm365, %v467, 0
        %v677 = vsel %vm365, %v472, 0
        %v680 = vsel %vm365, %v586, 0
        %682 = vmatprep.subr.mxu0 0.0
        %683 = vmatpush1.xpose.msra.mxu0 0.0
        %684 = vmatprep.subr.mxu0 0.0
        %685 = vmatpush1.xpose.msra.mxu0 0.0
        %686 = vmatprep.subr.mxu0 0.0
        %687 = vmatpush1.xpose.msra.mxu0 0.0
        %688 = vmatprep.subr.mxu0 0.0
        %689 = vmatpush1.xpose.msra.mxu0 0.0
        %690 = vmatprep.subr.mxu0 0.0
        %691 = vmatpush1.xpose.msra.mxu0 0.0
        %692 = vmatprep.subr.mxu0 0.0
        %693 = vmatpush1.xpose.msra.mxu0 0.0
        %694 = vmatprep.subr.mxu0 0.0
        %695 = vmatpush1.xpose.msra.mxu0 0.0
        %696 = vmatprep.subr.mxu0 0.0
        %697 = vmatpush1.xpose.msra.mxu0 0.0
        %698 = vmatprep.subr.mxu0 0.0
        %699 = vmatpush1.xpose.msra.mxu0 0.0
        %700 = vmatprep.subr.mxu0 0.0
        %701 = vmatpush1.xpose.msra.mxu0 0.0
        %702 = vmatprep.subr.mxu0 0.0
        %703 = vmatpush1.xpose.msra.mxu0 0.0
        %704 = vmatprep.subr.mxu0 0.0
        %705 = vmatpush1.xpose.msra.mxu0 0.0
        %706 = vmatprep.subr.mxu0 0.0
        %707 = vmatpush1.xpose.msra.mxu0 0.0
        %708 = vmatprep.subr.mxu0 0.0
        %709 = vmatpush1.xpose.msra.mxu0 0.0
        %710 = vmatprep.subr.mxu0 0.0
        %711 = vmatpush1.xpose.msra.mxu0 0.0
        %712 = vmatprep.subr.mxu0 0.0
        %713 = vmatpush1.xpose.msra.mxu0 %v680
        %714 = vmatprep.subr.mxu0 0.0
        %715 = vmatpush2.xpose.msra.mxu0 0.0
        %716 = vmatprep.subr.mxu0 0.0
        %717 = vmatpush2.xpose.msra.mxu0 0.0
        %718 = vmatprep.subr.mxu0 0.0
        %719 = vmatpush2.xpose.msra.mxu0 0.0
        %720 = vmatprep.subr.mxu0 0.0
        %721 = vmatpush2.xpose.msra.mxu0 0.0
        %722 = vmatprep.subr.mxu0 0.0
        %723 = vmatpush2.xpose.msra.mxu0 0.0
        %724 = vmatprep.subr.mxu0 0.0
        %725 = vmatpush2.xpose.msra.mxu0 0.0
        %726 = vmatprep.subr.mxu0 0.0
        %727 = vmatpush2.xpose.msra.mxu0 0.0
        %728 = vmatprep.subr.mxu0 0.0
        %729 = vmatpush2.xpose.msra.mxu0 0.0
        %730 = vmatprep.subr.mxu0 0.0
        %731 = vmatpush2.xpose.msra.mxu0 0.0
        %732 = vmatprep.subr.mxu0 0.0
        %733 = vmatpush2.xpose.msra.mxu0 0.0
        %734 = vmatprep.subr.mxu0 0.0
        %735 = vmatpush2.xpose.msra.mxu0 0.0
        %736 = vmatprep.subr.mxu0 0.0
        %737 = vmatpush2.xpose.msra.mxu0 0.0
        %738 = vmatprep.subr.mxu0 0.0
        %739 = vmatpush2.xpose.msra.mxu0 0.0
        %740 = vmatprep.subr.mxu0 0.0
        %741 = vmatpush2.xpose.msra.mxu0 0.0
        %742 = vmatprep.subr.mxu0 0.0
        %743 = vmatpush2.xpose.msra.mxu0 0.0
        %744 = vmatprep.subr.mxu0 0.0
        %745 = vmatpush2.xpose.msra.mxu0 0.0
        %746 = vmatprep.mubr.f32.mxu0 0.0
        %747 = vmatmul.mubr.f32.gmra.mxu0 %v674
        %v748 = vpop.f32.mrf.mxu0
        %v749 = vadd.f32 0.0, %v748
        %v750 = vpop.f32.mrf.mxu0
        %751 = vmatprep.mubr.f32.mxu0 0.0
        %752 = vmatmul.mubr.f32.gmra.mxu0 %v677
        %v753 = vpop.f32.mrf.mxu0
        %v754 = vadd.f32 0.0, %v753
        %v755 = vpop.f32.mrf.mxu0
        %756 = vdwg.mxu0
        %v757 = vmul.f32 %v665, 0.17677669
        %v758 = vmul.f32 %v670, 0.17677669
        %v759 = vmul.f32 %v749, 0.17677669
        %v760 = vmul.f32 %v754, 0.17677669
        %vm761 = vcmask 64512
        %v762 = vsel %vm761, %v757, -inf
        %763 = vmax.xlane.f32.xlu0 %v762
        %v764 = vpop.xlane.xlu0 %763
        %v765 = vsel %vm761, %v758, -inf
        %766 = vmax.xlane.f32.xlu0 %v765
        %v767 = vpop.xlane.xlu0 %766
        %v768 = vsel %vm761, %v759, -inf
        %769 = vmax.xlane.f32.xlu0 %v768
        %v770 = vpop.xlane.xlu0 %769
        %v771 = vsel %vm761, %v760, -inf
        %772 = vmax.xlane.f32.xlu0 %v771
        %v773 = vpop.xlane.xlu0 %772
        %v774 = vsub.f32 %v757, %v764
        %v775 = vsub.f32 %v758, %v767
        %v776 = vsub.f32 %v759, %v770
        %v777 = vsub.f32 %v760, %v773
        %v778 = vmul.f32 %v774, 1.442695
        %v779 = vpow.pop %v778
        %v780 = vmul.f32 %v775, 1.442695
        %v781 = vpow.pop %v780
        %v782 = vmul.f32 %v776, 1.442695
        %v783 = vpow.pop %v782
        %v784 = vmul.f32 %v777, 1.442695
        %v785 = vpow.pop %v784
        %v786 = vsel %vm761, %v779, 0.0
        %787 = vadd.xlane.f32.xlu0 %v786
        %v788 = vpop.xlane.xlu0 %787
        %v789 = vsel %vm761, %v781, 0.0
        %790 = vadd.xlane.f32.xlu0 %v789
        %v791 = vpop.xlane.xlu0 %790
        %v792 = vsel %vm761, %v783, 0.0
        %793 = vadd.xlane.f32.xlu0 %v792
        %v794 = vpop.xlane.xlu0 %793
        %v795 = vsel %vm761, %v785, 0.0
        %796 = vadd.xlane.f32.xlu0 %v795
        %v797 = vpop.xlane.xlu0 %796
        %v798 = vrcp.pop %v788
        %v799 = vrcp.pop %v791
        %v800 = vrcp.pop %v794
        %v801 = vrcp.pop %v797
        %v802 = vmul.f32 %v779, %v798
        %v803 = vmul.f32 %v781, %v799
        %v804 = vmul.f32 %v783, %v800
        %v805 = vmul.f32 %v785, %v801
        %806 = vrot.lane.b32.xlu0 %v581, 96
        %v807 = vpop.permute.xlu0 %806
        %v810 = vsel %vm761, %v802, 0
        %v813 = vsel %vm761, %v803, 0
        %815 = vmatprep.subr.mxu0 0.0
        %816 = vmatpush1.msra.mxu0 0.0
        %817 = vmatprep.subr.mxu0 0.0
        %818 = vmatpush1.msra.mxu0 0.0
        %819 = vmatprep.subr.mxu0 0.0
        %820 = vmatpush1.msra.mxu0 0.0
        %821 = vmatprep.subr.mxu0 0.0
        %822 = vmatpush1.msra.mxu0 0.0
        %823 = vmatprep.subr.mxu0 0.0
        %824 = vmatpush1.msra.mxu0 0.0
        %825 = vmatprep.subr.mxu0 0.0
        %826 = vmatpush1.msra.mxu0 0.0
        %827 = vmatprep.subr.mxu0 0.0
        %828 = vmatpush1.msra.mxu0 0.0
        %829 = vmatprep.subr.mxu0 0.0
        %830 = vmatpush1.msra.mxu0 0.0
        %831 = vmatprep.subr.mxu0 0.0
        %832 = vmatpush1.msra.mxu0 0.0
        %833 = vmatprep.subr.mxu0 0.0
        %834 = vmatpush1.msra.mxu0 0.0
        %835 = vmatprep.subr.mxu0 0.0
        %836 = vmatpush1.msra.mxu0 0.0
        %837 = vmatprep.subr.mxu0 0.0
        %838 = vmatpush1.msra.mxu0 0.0
        %839 = vmatprep.subr.mxu0 0.0
        %840 = vmatpush1.msra.mxu0 0.0
        %841 = vmatprep.subr.mxu0 0.0
        %842 = vmatpush1.msra.mxu0 0.0
        %843 = vmatprep.subr.mxu0 0.0
        %844 = vmatpush1.msra.mxu0 0.0
        %845 = vmatprep.subr.mxu0 0.0
        %846 = vmatpush1.msra.mxu0 %v807
        %847 = vmatprep.subr.mxu0 0.0
        %848 = vmatpush2.msra.mxu0 0.0
        %849 = vmatprep.subr.mxu0 0.0
        %850 = vmatpush2.msra.mxu0 0.0
        %851 = vmatprep.subr.mxu0 0.0
        %852 = vmatpush2.msra.mxu0 0.0
        %853 = vmatprep.subr.mxu0 0.0
        %854 = vmatpush2.msra.mxu0 0.0
        %855 = vmatprep.subr.mxu0 0.0
        %856 = vmatpush2.msra.mxu0 0.0
        %857 = vmatprep.subr.mxu0 0.0
        %858 = vmatpush2.msra.mxu0 0.0
        %859 = vmatprep.subr.mxu0 0.0
        %860 = vmatpush2.msra.mxu0 0.0
        %861 = vmatprep.subr.mxu0 0.0
        %862 = vmatpush2.msra.mxu0 0.0
        %863 = vmatprep.subr.mxu0 0.0
        %864 = vmatpush2.msra.mxu0 0.0
        %865 = vmatprep.subr.mxu0 0.0
        %866 = vmatpush2.msra.mxu0 0.0
        %867 = vmatprep.subr.mxu0 0.0
        %868 = vmatpush2.msra.mxu0 0.0
        %869 = vmatprep.subr.mxu0 0.0
        %870 = vmatpush2.msra.mxu0 0.0
        %871 = vmatprep.subr.mxu0 0.0
        %872 = vmatpush2.msra.mxu0 0.0
        %873 = vmatprep.subr.mxu0 0.0
        %874 = vmatpush2.msra.mxu0 0.0
        %875 = vmatprep.subr.mxu0 0.0
        %876 = vmatpush2.msra.mxu0 0.0
        %877 = vmatprep.subr.mxu0 0.0
        %878 = vmatpush2.msra.mxu0 0.0
        %879 = vmatprep.mubr.f32.mxu0 0.0
        %880 = vmatmul.mubr.f32.gmra.mxu0 %v810
        %v881 = vpop.f32.mrf.mxu0
        %v882 = vadd.f32 0.0, %v881
        %v883 = vpop.f32.mrf.mxu0
        %884 = vmatprep.mubr.f32.mxu0 0.0
        %885 = vmatmul.mubr.f32.gmra.mxu0 %v813
        %v886 = vpop.f32.mrf.mxu0
        %v887 = vadd.f32 0.0, %v886
        %v888 = vpop.f32.mrf.mxu0
        %889 = vdwg.mxu0
        %890 = vrot.lane.b32.xlu0 %v586, 96
        %v891 = vpop.permute.xlu0 %890
        %v894 = vsel %vm761, %v804, 0
        %v897 = vsel %vm761, %v805, 0
        %899 = vmatprep.subr.mxu0 0.0
        %900 = vmatpush1.msra.mxu0 0.0
        %901 = vmatprep.subr.mxu0 0.0
        %902 = vmatpush1.msra.mxu0 0.0
        %903 = vmatprep.subr.mxu0 0.0
        %904 = vmatpush1.msra.mxu0 0.0
        %905 = vmatprep.subr.mxu0 0.0
        %906 = vmatpush1.msra.mxu0 0.0
        %907 = vmatprep.subr.mxu0 0.0
        %908 = vmatpush1.msra.mxu0 0.0
        %909 = vmatprep.subr.mxu0 0.0
        %910 = vmatpush1.msra.mxu0 0.0
        %911 = vmatprep.subr.mxu0 0.0
        %912 = vmatpush1.msra.mxu0 0.0
        %913 = vmatprep.subr.mxu0 0.0
        %914 = vmatpush1.msra.mxu0 0.0
        %915 = vmatprep.subr.mxu0 0.0
        %916 = vmatpush1.msra.mxu0 0.0
        %917 = vmatprep.subr.mxu0 0.0
        %918 = vmatpush1.msra.mxu0 0.0
        %919 = vmatprep.subr.mxu0 0.0
        %920 = vmatpush1.msra.mxu0 0.0
        %921 = vmatprep.subr.mxu0 0.0
        %922 = vmatpush1.msra.mxu0 0.0
        %923 = vmatprep.subr.mxu0 0.0
        %924 = vmatpush1.msra.mxu0 0.0
        %925 = vmatprep.subr.mxu0 0.0
        %926 = vmatpush1.msra.mxu0 0.0
        %927 = vmatprep.subr.mxu0 0.0
        %928 = vmatpush1.msra.mxu0 0.0
        %929 = vmatprep.subr.mxu0 0.0
        %930 = vmatpush1.msra.mxu0 %v891
        %931 = vmatprep.subr.mxu0 0.0
        %932 = vmatpush2.msra.mxu0 0.0
        %933 = vmatprep.subr.mxu0 0.0
        %934 = vmatpush2.msra.mxu0 0.0
        %935 = vmatprep.subr.mxu0 0.0
        %936 = vmatpush2.msra.mxu0 0.0
        %937 = vmatprep.subr.mxu0 0.0
        %938 = vmatpush2.msra.mxu0 0.0
        %939 = vmatprep.subr.mxu0 0.0
        %940 = vmatpush2.msra.mxu0 0.0
        %941 = vmatprep.subr.mxu0 0.0
        %942 = vmatpush2.msra.mxu0 0.0
        %943 = vmatprep.subr.mxu0 0.0
        %944 = vmatpush2.msra.mxu0 0.0
        %945 = vmatprep.subr.mxu0 0.0
        %946 = vmatpush2.msra.mxu0 0.0
        %947 = vmatprep.subr.mxu0 0.0
        %948 = vmatpush2.msra.mxu0 0.0
        %949 = vmatprep.subr.mxu0 0.0
        %950 = vmatpush2.msra.mxu0 0.0
        %951 = vmatprep.subr.mxu0 0.0
        %952 = vmatpush2.msra.mxu0 0.0
        %953 = vmatprep.subr.mxu0 0.0
        %954 = vmatpush2.msra.mxu0 0.0
        %955 = vmatprep.subr.mxu0 0.0
        %956 = vmatpush2.msra.mxu0 0.0
        %957 = vmatprep.subr.mxu0 0.0
        %958 = vmatpush2.msra.mxu0 0.0
        %959 = vmatprep.subr.mxu0 0.0
        %960 = vmatpush2.msra.mxu0 0.0
        %961 = vmatprep.subr.mxu0 0.0
        %962 = vmatpush2.msra.mxu0 0.0
        %963 = vmatprep.mubr.f32.mxu0 0.0
        %964 = vmatmul.mubr.f32.gmra.mxu0 %v894
        %v965 = vpop.f32.mrf.mxu0
        %v966 = vadd.f32 0.0, %v965
        %v967 = vpop.f32.mrf.mxu0
        %968 = vmatprep.mubr.f32.mxu0 0.0
        %969 = vmatmul.mubr.f32.gmra.mxu0 %v897
        %v970 = vpop.f32.mrf.mxu0
        %v971 = vadd.f32 0.0, %v970
        %v972 = vpop.f32.mrf.mxu0
        %973 = vdwg.mxu0
        %v974 = vld [vmem:[%s6] sm:$0xff]
        %v975 = vld [vmem:[%s6 + $0x8] sm:$0xff]
        %v976 = vld [vmem:[#allocation6] sm:$0xff]
        %v977 = vld [vmem:[#allocation6 + $0x8] sm:$0xff]
        %v979 = vsel %vm365, %v974, 0
        %v982 = vsel %vm365, %v975, 0
        %v985 = vsel %vm365, %v882, 0
        %v988 = vsel %vm365, %v887, 0
        %990 = vmatprep.subr.mxu0 0.0
        %991 = vmatpush1.xpose.msra.mxu0 0.0
        %992 = vmatprep.subr.mxu0 0.0
        %993 = vmatpush1.xpose.msra.mxu0 0.0
        %994 = vmatprep.subr.mxu0 0.0
        %995 = vmatpush1.xpose.msra.mxu0 0.0
        %996 = vmatprep.subr.mxu0 0.0
        %997 = vmatpush1.xpose.msra.mxu0 0.0
        %998 = vmatprep.subr.mxu0 0.0
        %999 = vmatpush1.xpose.msra.mxu0 0.0
        %1000 = vmatprep.subr.mxu0 0.0
        %1001 = vmatpush1.xpose.msra.mxu0 0.0
        %1002 = vmatprep.subr.mxu0 0.0
        %1003 = vmatpush1.xpose.msra.mxu0 0.0
        %1004 = vmatprep.subr.mxu0 0.0
        %1005 = vmatpush1.xpose.msra.mxu0 0.0
        %1006 = vmatprep.subr.mxu0 0.0
        %1007 = vmatpush1.xpose.msra.mxu0 0.0
        %1008 = vmatprep.subr.mxu0 0.0
        %1009 = vmatpush1.xpose.msra.mxu0 0.0
        %1010 = vmatprep.subr.mxu0 0.0
        %1011 = vmatpush1.xpose.msra.mxu0 0.0
        %1012 = vmatprep.subr.mxu0 0.0
        %1013 = vmatpush1.xpose.msra.mxu0 0.0
        %1014 = vmatprep.subr.mxu0 0.0
        %1015 = vmatpush1.xpose.msra.mxu0 0.0
        %1016 = vmatprep.subr.mxu0 0.0
        %1017 = vmatpush1.xpose.msra.mxu0 0.0
        %1018 = vmatprep.subr.mxu0 0.0
        %1019 = vmatpush1.xpose.msra.mxu0 %v988
        %1020 = vmatprep.subr.mxu0 0.0
        %1021 = vmatpush1.xpose.msra.mxu0 %v985
        %1022 = vmatprep.subr.mxu0 0.0
        %1023 = vmatpush2.xpose.msra.mxu0 0.0
        %1024 = vmatprep.subr.mxu0 0.0
        %1025 = vmatpush2.xpose.msra.mxu0 0.0
        %1026 = vmatprep.subr.mxu0 0.0
        %1027 = vmatpush2.xpose.msra.mxu0 0.0
        %1028 = vmatprep.subr.mxu0 0.0
        %1029 = vmatpush2.xpose.msra.mxu0 0.0
        %1030 = vmatprep.subr.mxu0 0.0
        %1031 = vmatpush2.xpose.msra.mxu0 0.0
        %1032 = vmatprep.subr.mxu0 0.0
        %1033 = vmatpush2.xpose.msra.mxu0 0.0
        %1034 = vmatprep.subr.mxu0 0.0
        %1035 = vmatpush2.xpose.msra.mxu0 0.0
        %1036 = vmatprep.subr.mxu0 0.0
        %1037 = vmatpush2.xpose.msra.mxu0 0.0
        %1038 = vmatprep.subr.mxu0 0.0
        %1039 = vmatpush2.xpose.msra.mxu0 0.0
        %1040 = vmatprep.subr.mxu0 0.0
        %1041 = vmatpush2.xpose.msra.mxu0 0.0
        %1042 = vmatprep.subr.mxu0 0.0
        %1043 = vmatpush2.xpose.msra.mxu0 0.0
        %1044 = vmatprep.subr.mxu0 0.0
        %1045 = vmatpush2.xpose.msra.mxu0 0.0
        %1046 = vmatprep.subr.mxu0 0.0
        %1047 = vmatpush2.xpose.msra.mxu0 0.0
        %1048 = vmatprep.subr.mxu0 0.0
        %1049 = vmatpush2.xpose.msra.mxu0 0.0
        %1050 = vmatprep.subr.mxu0 0.0
        %1051 = vmatpush2.xpose.msra.mxu0 0.0
        %1052 = vmatprep.subr.mxu0 0.0
        %1053 = vmatpush2.xpose.msra.mxu0 0.0
        %1054 = vmatprep.mubr.f32.mxu0 0.0
        %1055 = vmatmul.mubr.f32.gmra.mxu0 %v979
        %v1056 = vpop.f32.mrf.mxu0
        %v1057 = vadd.f32 0.0, %v1056
        %v1058 = vpop.f32.mrf.mxu0
        %1059 = vmatprep.mubr.f32.mxu0 0.0
        %1060 = vmatmul.mubr.f32.gmra.mxu0 %v982
        %v1061 = vpop.f32.mrf.mxu0
        %v1062 = vadd.f32 0.0, %v1061
        %v1063 = vpop.f32.mrf.mxu0
        %1064 = vdwg.mxu0
        %v1066 = vsel %vm365, %v966, 0
        %v1069 = vsel %vm365, %v971, 0
        %1071 = vmatprep.subr.mxu0 0.0
        %1072 = vmatpush1.xpose.msra.mxu0 0.0
        %1073 = vmatprep.subr.mxu0 0.0
        %1074 = vmatpush1.xpose.msra.mxu0 0.0
        %1075 = vmatprep.subr.mxu0 0.0
        %1076 = vmatpush1.xpose.msra.mxu0 0.0
        %1077 = vmatprep.subr.mxu0 0.0
        %1078 = vmatpush1.xpose.msra.mxu0 0.0
        %1079 = vmatprep.subr.mxu0 0.0
        %1080 = vmatpush1.xpose.msra.mxu0 0.0
        %1081 = vmatprep.subr.mxu0 0.0
        %1082 = vmatpush1.xpose.msra.mxu0 0.0
        %1083 = vmatprep.subr.mxu0 0.0
        %1084 = vmatpush1.xpose.msra.mxu0 0.0
        %1085 = vmatprep.subr.mxu0 0.0
        %1086 = vmatpush1.xpose.msra.mxu0 0.0
        %1087 = vmatprep.subr.mxu0 0.0
        %1088 = vmatpush1.xpose.msra.mxu0 0.0
        %1089 = vmatprep.subr.mxu0 0.0
        %1090 = vmatpush1.xpose.msra.mxu0 0.0
        %1091 = vmatprep.subr.mxu0 0.0
        %1092 = vmatpush1.xpose.msra.mxu0 0.0
        %1093 = vmatprep.subr.mxu0 0.0
        %1094 = vmatpush1.xpose.msra.mxu0 0.0
        %1095 = vmatprep.subr.mxu0 0.0
        %1096 = vmatpush1.xpose.msra.mxu0 0.0
        %1097 = vmatprep.subr.mxu0 0.0
        %1098 = vmatpush1.xpose.msra.mxu0 0.0
        %1099 = vmatprep.subr.mxu0 0.0
        %1100 = vmatpush1.xpose.msra.mxu0 %v1069
        %1101 = vmatprep.subr.mxu0 0.0
        %1102 = vmatpush1.xpose.msra.mxu0 %v1066
        %1103 = vmatprep.subr.mxu0 0.0
        %1104 = vmatpush2.xpose.msra.mxu0 0.0
        %1105 = vmatprep.subr.mxu0 0.0
        %1106 = vmatpush2.xpose.msra.mxu0 0.0
        %1107 = vmatprep.subr.mxu0 0.0
        %1108 = vmatpush2.xpose.msra.mxu0 0.0
        %1109 = vmatprep.subr.mxu0 0.0
        %1110 = vmatpush2.xpose.msra.mxu0 0.0
        %1111 = vmatprep.subr.mxu0 0.0
        %1112 = vmatpush2.xpose.msra.mxu0 0.0
        %1113 = vmatprep.subr.mxu0 0.0
        %1114 = vmatpush2.xpose.msra.mxu0 0.0
        %1115 = vmatprep.subr.mxu0 0.0
        %1116 = vmatpush2.xpose.msra.mxu0 0.0
        %1117 = vmatprep.subr.mxu0 0.0
        %1118 = vmatpush2.xpose.msra.mxu0 0.0
        %1119 = vmatprep.subr.mxu0 0.0
        %1120 = vmatpush2.xpose.msra.mxu0 0.0
        %1121 = vmatprep.subr.mxu0 0.0
        %1122 = vmatpush2.xpose.msra.mxu0 0.0
        %1123 = vmatprep.subr.mxu0 0.0
        %1124 = vmatpush2.xpose.msra.mxu0 0.0
        %1125 = vmatprep.subr.mxu0 0.0
        %1126 = vmatpush2.xpose.msra.mxu0 0.0
        %1127 = vmatprep.subr.mxu0 0.0
        %1128 = vmatpush2.xpose.msra.mxu0 0.0
        %1129 = vmatprep.subr.mxu0 0.0
        %1130 = vmatpush2.xpose.msra.mxu0 0.0
        %1131 = vmatprep.subr.mxu0 0.0
        %1132 = vmatpush2.xpose.msra.mxu0 0.0
        %1133 = vmatprep.subr.mxu0 0.0
        %1134 = vmatpush2.xpose.msra.mxu0 0.0
        %1135 = vmatprep.mubr.f32.mxu0 0.0
        %1136 = vmatmul.mubr.f32.gmra.mxu0 %v979
        %v1137 = vpop.f32.mrf.mxu0
        %v1138 = vadd.f32 0.0, %v1137
        %v1139 = vpop.f32.mrf.mxu0
        %1140 = vmatprep.mubr.f32.mxu0 0.0
        %1141 = vmatmul.mubr.f32.gmra.mxu0 %v982
        %v1142 = vpop.f32.mrf.mxu0
        %v1143 = vadd.f32 0.0, %v1142
        %v1144 = vpop.f32.mrf.mxu0
        %1145 = vdwg.mxu0
        %s1146 = scalar_lea.vmem %s6, 16
        %v1147 = vld [vmem:[%s1146] sm:$0xff]
        %v1148 = vld [vmem:[%s1146 + $0x8] sm:$0xff]
        %s1149 = scalar_lea.vmem [#allocation6], 16
        %v1150 = vld [vmem:[%s1149] sm:$0xff]
        %v1151 = vld [vmem:[%s1149 + $0x8] sm:$0xff]
        %v1153 = vsel %vm365, %v1147, 0
        %v1156 = vsel %vm365, %v1148, 0
        %1158 = vmatprep.subr.mxu0 0.0
        %1159 = vmatpush1.xpose.msra.mxu0 0.0
        %1160 = vmatprep.subr.mxu0 0.0
        %1161 = vmatpush1.xpose.msra.mxu0 0.0
        %1162 = vmatprep.subr.mxu0 0.0
        %1163 = vmatpush1.xpose.msra.mxu0 0.0
        %1164 = vmatprep.subr.mxu0 0.0
        %1165 = vmatpush1.xpose.msra.mxu0 0.0
        %1166 = vmatprep.subr.mxu0 0.0
        %1167 = vmatpush1.xpose.msra.mxu0 0.0
        %1168 = vmatprep.subr.mxu0 0.0
        %1169 = vmatpush1.xpose.msra.mxu0 0.0
        %1170 = vmatprep.subr.mxu0 0.0
        %1171 = vmatpush1.xpose.msra.mxu0 0.0
        %1172 = vmatprep.subr.mxu0 0.0
        %1173 = vmatpush1.xpose.msra.mxu0 0.0
        %1174 = vmatprep.subr.mxu0 0.0
        %1175 = vmatpush1.xpose.msra.mxu0 0.0
        %1176 = vmatprep.subr.mxu0 0.0
        %1177 = vmatpush1.xpose.msra.mxu0 0.0
        %1178 = vmatprep.subr.mxu0 0.0
        %1179 = vmatpush1.xpose.msra.mxu0 0.0
        %1180 = vmatprep.subr.mxu0 0.0
        %1181 = vmatpush1.xpose.msra.mxu0 0.0
        %1182 = vmatprep.subr.mxu0 0.0
        %1183 = vmatpush1.xpose.msra.mxu0 0.0
        %1184 = vmatprep.subr.mxu0 0.0
        %1185 = vmatpush1.xpose.msra.mxu0 0.0
        %1186 = vmatprep.subr.mxu0 0.0
        %1187 = vmatpush1.xpose.msra.mxu0 %v988
        %1188 = vmatprep.subr.mxu0 0.0
        %1189 = vmatpush1.xpose.msra.mxu0 %v985
        %1190 = vmatprep.subr.mxu0 0.0
        %1191 = vmatpush2.xpose.msra.mxu0 0.0
        %1192 = vmatprep.subr.mxu0 0.0
        %1193 = vmatpush2.xpose.msra.mxu0 0.0
        %1194 = vmatprep.subr.mxu0 0.0
        %1195 = vmatpush2.xpose.msra.mxu0 0.0
        %1196 = vmatprep.subr.mxu0 0.0
        %1197 = vmatpush2.xpose.msra.mxu0 0.0
        %1198 = vmatprep.subr.mxu0 0.0
        %1199 = vmatpush2.xpose.msra.mxu0 0.0
        %1200 = vmatprep.subr.mxu0 0.0
        %1201 = vmatpush2.xpose.msra.mxu0 0.0
        %1202 = vmatprep.subr.mxu0 0.0
        %1203 = vmatpush2.xpose.msra.mxu0 0.0
        %1204 = vmatprep.subr.mxu0 0.0
        %1205 = vmatpush2.xpose.msra.mxu0 0.0
        %1206 = vmatprep.subr.mxu0 0.0
        %1207 = vmatpush2.xpose.msra.mxu0 0.0
        %1208 = vmatprep.subr.mxu0 0.0
        %1209 = vmatpush2.xpose.msra.mxu0 0.0
        %1210 = vmatprep.subr.mxu0 0.0
        %1211 = vmatpush2.xpose.msra.mxu0 0.0
        %1212 = vmatprep.subr.mxu0 0.0
        %1213 = vmatpush2.xpose.msra.mxu0 0.0
        %1214 = vmatprep.subr.mxu0 0.0
        %1215 = vmatpush2.xpose.msra.mxu0 0.0
        %1216 = vmatprep.subr.mxu0 0.0
        %1217 = vmatpush2.xpose.msra.mxu0 0.0
        %1218 = vmatprep.subr.mxu0 0.0
        %1219 = vmatpush2.xpose.msra.mxu0 0.0
        %1220 = vmatprep.subr.mxu0 0.0
        %1221 = vmatpush2.xpose.msra.mxu0 0.0
        %1222 = vmatprep.mubr.f32.mxu0 0.0
        %1223 = vmatmul.mubr.f32.gmra.mxu0 %v1153
        %v1224 = vpop.f32.mrf.mxu0
        %v1225 = vadd.f32 0.0, %v1224
        %v1226 = vpop.f32.mrf.mxu0
        %1227 = vmatprep.mubr.f32.mxu0 0.0
        %1228 = vmatmul.mubr.f32.gmra.mxu0 %v1156
        %v1229 = vpop.f32.mrf.mxu0
        %v1230 = vadd.f32 0.0, %v1229
        %v1231 = vpop.f32.mrf.mxu0
        %1232 = vdwg.mxu0
        %1233 = vmatprep.subr.mxu0 0.0
        %1234 = vmatpush1.xpose.msra.mxu0 0.0
        %1235 = vmatprep.subr.mxu0 0.0
        %1236 = vmatpush1.xpose.msra.mxu0 0.0
        %1237 = vmatprep.subr.mxu0 0.0
        %1238 = vmatpush1.xpose.msra.mxu0 0.0
        %1239 = vmatprep.subr.mxu0 0.0
        %1240 = vmatpush1.xpose.msra.mxu0 0.0
        %1241 = vmatprep.subr.mxu0 0.0
        %1242 = vmatpush1.xpose.msra.mxu0 0.0
        %1243 = vmatprep.subr.mxu0 0.0
        %1244 = vmatpush1.xpose.msra.mxu0 0.0
        %1245 = vmatprep.subr.mxu0 0.0
        %1246 = vmatpush1.xpose.msra.mxu0 0.0
        %1247 = vmatprep.subr.mxu0 0.0
        %1248 = vmatpush1.xpose.msra.mxu0 0.0
        %1249 = vmatprep.subr.mxu0 0.0
        %1250 = vmatpush1.xpose.msra.mxu0 0.0
        %1251 = vmatprep.subr.mxu0 0.0
        %1252 = vmatpush1.xpose.msra.mxu0 0.0
        %1253 = vmatprep.subr.mxu0 0.0
        %1254 = vmatpush1.xpose.msra.mxu0 0.0
        %1255 = vmatprep.subr.mxu0 0.0
        %1256 = vmatpush1.xpose.msra.mxu0 0.0
        %1257 = vmatprep.subr.mxu0 0.0
        %1258 = vmatpush1.xpose.msra.mxu0 0.0
        %1259 = vmatprep.subr.mxu0 0.0
        %1260 = vmatpush1.xpose.msra.mxu0 0.0
        %1261 = vmatprep.subr.mxu0 0.0
        %1262 = vmatpush1.xpose.msra.mxu0 %v1069
        %1263 = vmatprep.subr.mxu0 0.0
        %1264 = vmatpush1.xpose.msra.mxu0 %v1066
        %1265 = vmatprep.subr.mxu0 0.0
        %1266 = vmatpush2.xpose.msra.mxu0 0.0
        %1267 = vmatprep.subr.mxu0 0.0
        %1268 = vmatpush2.xpose.msra.mxu0 0.0
        %1269 = vmatprep.subr.mxu0 0.0
        %1270 = vmatpush2.xpose.msra.mxu0 0.0
        %1271 = vmatprep.subr.mxu0 0.0
        %1272 = vmatpush2.xpose.msra.mxu0 0.0
        %1273 = vmatprep.subr.mxu0 0.0
        %1274 = vmatpush2.xpose.msra.mxu0 0.0
        %1275 = vmatprep.subr.mxu0 0.0
        %1276 = vmatpush2.xpose.msra.mxu0 0.0
        %1277 = vmatprep.subr.mxu0 0.0
        %1278 = vmatpush2.xpose.msra.mxu0 0.0
        %1279 = vmatprep.subr.mxu0 0.0
        %1280 = vmatpush2.xpose.msra.mxu0 0.0
        %1281 = vmatprep.subr.mxu0 0.0
        %1282 = vmatpush2.xpose.msra.mxu0 0.0
        %1283 = vmatprep.subr.mxu0 0.0
        %1284 = vmatpush2.xpose.msra.mxu0 0.0
        %1285 = vmatprep.subr.mxu0 0.0
        %1286 = vmatpush2.xpose.msra.mxu0 0.0
        %1287 = vmatprep.subr.mxu0 0.0
        %1288 = vmatpush2.xpose.msra.mxu0 0.0
        %1289 = vmatprep.subr.mxu0 0.0
        %1290 = vmatpush2.xpose.msra.mxu0 0.0
        %1291 = vmatprep.subr.mxu0 0.0
        %1292 = vmatpush2.xpose.msra.mxu0 0.0
        %1293 = vmatprep.subr.mxu0 0.0
        %1294 = vmatpush2.xpose.msra.mxu0 0.0
        %1295 = vmatprep.subr.mxu0 0.0
        %1296 = vmatpush2.xpose.msra.mxu0 0.0
        %1297 = vmatprep.mubr.f32.mxu0 0.0
        %1298 = vmatmul.mubr.f32.gmra.mxu0 %v1153
        %v1299 = vpop.f32.mrf.mxu0
        %v1300 = vadd.f32 0.0, %v1299
        %v1301 = vpop.f32.mrf.mxu0
        %1302 = vmatprep.mubr.f32.mxu0 0.0
        %1303 = vmatmul.mubr.f32.gmra.mxu0 %v1156
        %v1304 = vpop.f32.mrf.mxu0
        %v1305 = vadd.f32 0.0, %v1304
        %v1306 = vpop.f32.mrf.mxu0
        %1307 = vdwg.mxu0
        %v1309 = vsel %vm483, %v1225, 0
        %v1312 = vsel %vm483, %v1230, 0
        %1314 = vmatprep.subr.mxu0 0.0
        %1315 = vmatpush1.msra.mxu0 0.0
        %1316 = vmatprep.subr.mxu0 0.0
        %1317 = vmatpush1.msra.mxu0 0.0
        %1318 = vmatprep.subr.mxu0 0.0
        %1319 = vmatpush1.msra.mxu0 0.0
        %1320 = vmatprep.subr.mxu0 0.0
        %1321 = vmatpush1.msra.mxu0 0.0
        %1322 = vmatprep.subr.mxu0 0.0
        %1323 = vmatpush1.msra.mxu0 0.0
        %1324 = vmatprep.subr.mxu0 0.0
        %1325 = vmatpush1.msra.mxu0 0.0
        %1326 = vmatprep.subr.mxu0 0.0
        %1327 = vmatpush1.msra.mxu0 0.0
        %1328 = vmatprep.subr.mxu0 0.0
        %1329 = vmatpush1.msra.mxu0 0.0
        %1330 = vmatprep.subr.mxu0 0.0
        %1331 = vmatpush1.msra.mxu0 0.0
        %1332 = vmatprep.subr.mxu0 0.0
        %1333 = vmatpush1.msra.mxu0 0.0
        %1334 = vmatprep.subr.mxu0 0.0
        %1335 = vmatpush1.msra.mxu0 0.0
        %1336 = vmatprep.subr.mxu0 0.0
        %1337 = vmatpush1.msra.mxu0 0.0
        %1338 = vmatprep.subr.mxu0 0.0
        %1339 = vmatpush1.msra.mxu0 0.0
        %1340 = vmatprep.subr.mxu0 0.0
        %1341 = vmatpush1.msra.mxu0 0.0
        %1342 = vmatprep.subr.mxu0 0.0
        %1343 = vmatpush1.msra.mxu0 %v1151
        %1344 = vmatprep.subr.mxu0 0.0
        %1345 = vmatpush1.msra.mxu0 %v1150
        %1346 = vmatprep.subr.mxu0 0.0
        %1347 = vmatpush2.msra.mxu0 0.0
        %1348 = vmatprep.subr.mxu0 0.0
        %1349 = vmatpush2.msra.mxu0 0.0
        %1350 = vmatprep.subr.mxu0 0.0
        %1351 = vmatpush2.msra.mxu0 0.0
        %1352 = vmatprep.subr.mxu0 0.0
        %1353 = vmatpush2.msra.mxu0 0.0
        %1354 = vmatprep.subr.mxu0 0.0
        %1355 = vmatpush2.msra.mxu0 0.0
        %1356 = vmatprep.subr.mxu0 0.0
        %1357 = vmatpush2.msra.mxu0 0.0
        %1358 = vmatprep.subr.mxu0 0.0
        %1359 = vmatpush2.msra.mxu0 0.0
        %1360 = vmatprep.subr.mxu0 0.0
        %1361 = vmatpush2.msra.mxu0 0.0
        %1362 = vmatprep.subr.mxu0 0.0
        %1363 = vmatpush2.msra.mxu0 0.0
        %1364 = vmatprep.subr.mxu0 0.0
        %1365 = vmatpush2.msra.mxu0 0.0
        %1366 = vmatprep.subr.mxu0 0.0
        %1367 = vmatpush2.msra.mxu0 0.0
        %1368 = vmatprep.subr.mxu0 0.0
        %1369 = vmatpush2.msra.mxu0 0.0
        %1370 = vmatprep.subr.mxu0 0.0
        %1371 = vmatpush2.msra.mxu0 0.0
        %1372 = vmatprep.subr.mxu0 0.0
        %1373 = vmatpush2.msra.mxu0 0.0
        %1374 = vmatprep.subr.mxu0 0.0
        %1375 = vmatpush2.msra.mxu0 0.0
        %1376 = vmatprep.subr.mxu0 0.0
        %1377 = vmatpush2.msra.mxu0 0.0
        %1378 = vmatprep.mubr.f32.mxu0 0.0
        %1379 = vmatmul.mubr.f32.gmra.mxu0 %v1309
        %v1380 = vpop.f32.mrf.mxu0
        %v1381 = vadd.f32 0.0, %v1380
        %v1382 = vpop.f32.mrf.mxu0
        %1383 = vmatprep.mubr.f32.mxu0 0.0
        %1384 = vmatmul.mubr.f32.gmra.mxu0 %v1312
        %v1385 = vpop.f32.mrf.mxu0
        %v1386 = vadd.f32 0.0, %v1385
        %v1387 = vpop.f32.mrf.mxu0
        %1388 = vdwg.mxu0
        %v1390 = vsel %vm483, %v1300, 0
        %v1393 = vsel %vm483, %v1305, 0
        %1395 = vmatprep.subr.mxu0 0.0
        %1396 = vmatpush1.msra.mxu0 0.0
        %1397 = vmatprep.subr.mxu0 0.0
        %1398 = vmatpush1.msra.mxu0 0.0
        %1399 = vmatprep.subr.mxu0 0.0
        %1400 = vmatpush1.msra.mxu0 0.0
        %1401 = vmatprep.subr.mxu0 0.0
        %1402 = vmatpush1.msra.mxu0 0.0
        %1403 = vmatprep.subr.mxu0 0.0
        %1404 = vmatpush1.msra.mxu0 0.0
        %1405 = vmatprep.subr.mxu0 0.0
        %1406 = vmatpush1.msra.mxu0 0.0
        %1407 = vmatprep.subr.mxu0 0.0
        %1408 = vmatpush1.msra.mxu0 0.0
        %1409 = vmatprep.subr.mxu0 0.0
        %1410 = vmatpush1.msra.mxu0 0.0
        %1411 = vmatprep.subr.mxu0 0.0
        %1412 = vmatpush1.msra.mxu0 0.0
        %1413 = vmatprep.subr.mxu0 0.0
        %1414 = vmatpush1.msra.mxu0 0.0
        %1415 = vmatprep.subr.mxu0 0.0
        %1416 = vmatpush1.msra.mxu0 0.0
        %1417 = vmatprep.subr.mxu0 0.0
        %1418 = vmatpush1.msra.mxu0 0.0
        %1419 = vmatprep.subr.mxu0 0.0
        %1420 = vmatpush1.msra.mxu0 0.0
        %1421 = vmatprep.subr.mxu0 0.0
        %1422 = vmatpush1.msra.mxu0 0.0
        %1423 = vmatprep.subr.mxu0 0.0
        %1424 = vmatpush1.msra.mxu0 %v1151
        %1425 = vmatprep.subr.mxu0 0.0
        %1426 = vmatpush1.msra.mxu0 %v1150
        %1427 = vmatprep.subr.mxu0 0.0
        %1428 = vmatpush2.msra.mxu0 0.0
        %1429 = vmatprep.subr.mxu0 0.0
        %1430 = vmatpush2.msra.mxu0 0.0
        %1431 = vmatprep.subr.mxu0 0.0
        %1432 = vmatpush2.msra.mxu0 0.0
        %1433 = vmatprep.subr.mxu0 0.0
        %1434 = vmatpush2.msra.mxu0 0.0
        %1435 = vmatprep.subr.mxu0 0.0
        %1436 = vmatpush2.msra.mxu0 0.0
        %1437 = vmatprep.subr.mxu0 0.0
        %1438 = vmatpush2.msra.mxu0 0.0
        %1439 = vmatprep.subr.mxu0 0.0
        %1440 = vmatpush2.msra.mxu0 0.0
        %1441 = vmatprep.subr.mxu0 0.0
        %1442 = vmatpush2.msra.mxu0 0.0
        %1443 = vmatprep.subr.mxu0 0.0
        %1444 = vmatpush2.msra.mxu0 0.0
        %1445 = vmatprep.subr.mxu0 0.0
        %1446 = vmatpush2.msra.mxu0 0.0
        %1447 = vmatprep.subr.mxu0 0.0
        %1448 = vmatpush2.msra.mxu0 0.0
        %1449 = vmatprep.subr.mxu0 0.0
        %1450 = vmatpush2.msra.mxu0 0.0
        %1451 = vmatprep.subr.mxu0 0.0
        %1452 = vmatpush2.msra.mxu0 0.0
        %1453 = vmatprep.subr.mxu0 0.0
        %1454 = vmatpush2.msra.mxu0 0.0
        %1455 = vmatprep.subr.mxu0 0.0
        %1456 = vmatpush2.msra.mxu0 0.0
        %1457 = vmatprep.subr.mxu0 0.0
        %1458 = vmatpush2.msra.mxu0 0.0
        %1459 = vmatprep.mubr.f32.mxu0 0.0
        %1460 = vmatmul.mubr.f32.gmra.mxu0 %v1390
        %v1461 = vpop.f32.mrf.mxu0
        %v1462 = vadd.f32 0.0, %v1461
        %v1463 = vpop.f32.mrf.mxu0
        %1464 = vmatprep.mubr.f32.mxu0 0.0
        %1465 = vmatmul.mubr.f32.gmra.mxu0 %v1393
        %v1466 = vpop.f32.mrf.mxu0
        %v1467 = vadd.f32 0.0, %v1466
        %v1468 = vpop.f32.mrf.mxu0
        %1469 = vdwg.mxu0
        %v1471 = vsel %vm483, %v1057, 0
        %v1474 = vsel %vm483, %v1062, 0
        %1476 = vmatprep.subr.mxu0 0.0
        %1477 = vmatpush1.msra.mxu0 0.0
        %1478 = vmatprep.subr.mxu0 0.0
        %1479 = vmatpush1.msra.mxu0 0.0
        %1480 = vmatprep.subr.mxu0 0.0
        %1481 = vmatpush1.msra.mxu0 0.0
        %1482 = vmatprep.subr.mxu0 0.0
        %1483 = vmatpush1.msra.mxu0 0.0
        %1484 = vmatprep.subr.mxu0 0.0
        %1485 = vmatpush1.msra.mxu0 0.0
        %1486 = vmatprep.subr.mxu0 0.0
        %1487 = vmatpush1.msra.mxu0 0.0
        %1488 = vmatprep.subr.mxu0 0.0
        %1489 = vmatpush1.msra.mxu0 0.0
        %1490 = vmatprep.subr.mxu0 0.0
        %1491 = vmatpush1.msra.mxu0 0.0
        %1492 = vmatprep.subr.mxu0 0.0
        %1493 = vmatpush1.msra.mxu0 0.0
        %1494 = vmatprep.subr.mxu0 0.0
        %1495 = vmatpush1.msra.mxu0 0.0
        %1496 = vmatprep.subr.mxu0 0.0
        %1497 = vmatpush1.msra.mxu0 0.0
        %1498 = vmatprep.subr.mxu0 0.0
        %1499 = vmatpush1.msra.mxu0 0.0
        %1500 = vmatprep.subr.mxu0 0.0
        %1501 = vmatpush1.msra.mxu0 0.0
        %1502 = vmatprep.subr.mxu0 0.0
        %1503 = vmatpush1.msra.mxu0 0.0
        %1504 = vmatprep.subr.mxu0 0.0
        %1505 = vmatpush1.msra.mxu0 %v977
        %1506 = vmatprep.subr.mxu0 0.0
        %1507 = vmatpush1.msra.mxu0 %v976
        %1508 = vmatprep.subr.mxu0 0.0
        %1509 = vmatpush2.msra.mxu0 0.0
        %1510 = vmatprep.subr.mxu0 0.0
        %1511 = vmatpush2.msra.mxu0 0.0
        %1512 = vmatprep.subr.mxu0 0.0
        %1513 = vmatpush2.msra.mxu0 0.0
        %1514 = vmatprep.subr.mxu0 0.0
        %1515 = vmatpush2.msra.mxu0 0.0
        %1516 = vmatprep.subr.mxu0 0.0
        %1517 = vmatpush2.msra.mxu0 0.0
        %1518 = vmatprep.subr.mxu0 0.0
        %1519 = vmatpush2.msra.mxu0 0.0
        %1520 = vmatprep.subr.mxu0 0.0
        %1521 = vmatpush2.msra.mxu0 0.0
        %1522 = vmatprep.subr.mxu0 0.0
        %1523 = vmatpush2.msra.mxu0 0.0
        %1524 = vmatprep.subr.mxu0 0.0
        %1525 = vmatpush2.msra.mxu0 0.0
        %1526 = vmatprep.subr.mxu0 0.0
        %1527 = vmatpush2.msra.mxu0 0.0
        %1528 = vmatprep.subr.mxu0 0.0
        %1529 = vmatpush2.msra.mxu0 0.0
        %1530 = vmatprep.subr.mxu0 0.0
        %1531 = vmatpush2.msra.mxu0 0.0
        %1532 = vmatprep.subr.mxu0 0.0
        %1533 = vmatpush2.msra.mxu0 0.0
        %1534 = vmatprep.subr.mxu0 0.0
        %1535 = vmatpush2.msra.mxu0 0.0
        %1536 = vmatprep.subr.mxu0 0.0
        %1537 = vmatpush2.msra.mxu0 0.0
        %1538 = vmatprep.subr.mxu0 0.0
        %1539 = vmatpush2.msra.mxu0 0.0
        %1540 = vmatprep.mubr.f32.mxu0 0.0
        %1541 = vmatmul.mubr.f32.gmra.mxu0 %v1471
        %v1542 = vpop.f32.mrf.mxu0
        %v1543 = vadd.f32 %v1381, %v1542
        %v1544 = vpop.f32.mrf.mxu0
        %1545 = vmatprep.mubr.f32.mxu0 0.0
        %1546 = vmatmul.mubr.f32.gmra.mxu0 %v1474
        %v1547 = vpop.f32.mrf.mxu0
        %v1548 = vadd.f32 %v1386, %v1547
        %v1549 = vpop.f32.mrf.mxu0
        %1550 = vdwg.mxu0
        %v1552 = vsel %vm483, %v1138, 0
        %v1555 = vsel %vm483, %v1143, 0
        %1557 = vmatprep.subr.mxu0 0.0
        %1558 = vmatpush1.msra.mxu0 0.0
        %1559 = vmatprep.subr.mxu0 0.0
        %1560 = vmatpush1.msra.mxu0 0.0
        %1561 = vmatprep.subr.mxu0 0.0
        %1562 = vmatpush1.msra.mxu0 0.0
        %1563 = vmatprep.subr.mxu0 0.0
        %1564 = vmatpush1.msra.mxu0 0.0
        %1565 = vmatprep.subr.mxu0 0.0
        %1566 = vmatpush1.msra.mxu0 0.0
        %1567 = vmatprep.subr.mxu0 0.0
        %1568 = vmatpush1.msra.mxu0 0.0
        %1569 = vmatprep.subr.mxu0 0.0
        %1570 = vmatpush1.msra.mxu0 0.0
        %1571 = vmatprep.subr.mxu0 0.0
        %1572 = vmatpush1.msra.mxu0 0.0
        %1573 = vmatprep.subr.mxu0 0.0
        %1574 = vmatpush1.msra.mxu0 0.0
        %1575 = vmatprep.subr.mxu0 0.0
        %1576 = vmatpush1.msra.mxu0 0.0
        %1577 = vmatprep.subr.mxu0 0.0
        %1578 = vmatpush1.msra.mxu0 0.0
        %1579 = vmatprep.subr.mxu0 0.0
        %1580 = vmatpush1.msra.mxu0 0.0
        %1581 = vmatprep.subr.mxu0 0.0
        %1582 = vmatpush1.msra.mxu0 0.0
        %1583 = vmatprep.subr.mxu0 0.0
        %1584 = vmatpush1.msra.mxu0 0.0
        %1585 = vmatprep.subr.mxu0 0.0
        %1586 = vmatpush1.msra.mxu0 %v977
        %1587 = vmatprep.subr.mxu0 0.0
        %1588 = vmatpush1.msra.mxu0 %v976
        %1589 = vmatprep.subr.mxu0 0.0
        %1590 = vmatpush2.msra.mxu0 0.0
        %1591 = vmatprep.subr.mxu0 0.0
        %1592 = vmatpush2.msra.mxu0 0.0
        %1593 = vmatprep.subr.mxu0 0.0
        %1594 = vmatpush2.msra.mxu0 0.0
        %1595 = vmatprep.subr.mxu0 0.0
        %1596 = vmatpush2.msra.mxu0 0.0
        %1597 = vmatprep.subr.mxu0 0.0
        %1598 = vmatpush2.msra.mxu0 0.0
        %1599 = vmatprep.subr.mxu0 0.0
        %1600 = vmatpush2.msra.mxu0 0.0
        %1601 = vmatprep.subr.mxu0 0.0
        %1602 = vmatpush2.msra.mxu0 0.0
        %1603 = vmatprep.subr.mxu0 0.0
        %1604 = vmatpush2.msra.mxu0 0.0
        %1605 = vmatprep.subr.mxu0 0.0
        %1606 = vmatpush2.msra.mxu0 0.0
        %1607 = vmatprep.subr.mxu0 0.0
        %1608 = vmatpush2.msra.mxu0 0.0
        %1609 = vmatprep.subr.mxu0 0.0
        %1610 = vmatpush2.msra.mxu0 0.0
        %1611 = vmatprep.subr.mxu0 0.0
        %1612 = vmatpush2.msra.mxu0 0.0
        %1613 = vmatprep.subr.mxu0 0.0
        %1614 = vmatpush2.msra.mxu0 0.0
        %1615 = vmatprep.subr.mxu0 0.0
        %1616 = vmatpush2.msra.mxu0 0.0
        %1617 = vmatprep.subr.mxu0 0.0
        %1618 = vmatpush2.msra.mxu0 0.0
        %1619 = vmatprep.subr.mxu0 0.0
        %1620 = vmatpush2.msra.mxu0 0.0
        %1621 = vmatprep.mubr.f32.mxu0 0.0
        %1622 = vmatmul.mubr.f32.gmra.mxu0 %v1552
        %v1623 = vpop.f32.mrf.mxu0
        %v1624 = vadd.f32 %v1462, %v1623
        %v1625 = vpop.f32.mrf.mxu0
        %1626 = vmatprep.mubr.f32.mxu0 0.0
        %1627 = vmatmul.mubr.f32.gmra.mxu0 %v1555
        %v1628 = vpop.f32.mrf.mxu0
        %v1629 = vadd.f32 %v1467, %v1628
        %v1630 = vpop.f32.mrf.mxu0
        %1631 = vdwg.mxu0
        %1632 = vst.msk [vmem:[#allocation2] sm:$0xff] %vm365, %v1543
        %1633 = vst.msk [vmem:[#allocation2 + $0x8] sm:$0xff] %vm365, %v1548
        %1634 = vst.msk [vmem:[#allocation2 + $0x10] sm:$0xff] %vm365, %v1624
        %1635 = vst.msk [vmem:[#allocation2 + $0x18] sm:$0xff] %vm365, %v1629
        %p1636 = scmp.eq.s32.totalorder %s22, 1
        // Predicated region
        $region65: #{tpu_custom_call.1} parent=51 // pred_check
          %p1637 = pneg %p1636
        $region66: #{tpu_custom_call.1} parent=51 // pred_check_branch
          %1639 = sbr.rel (%p1637) target = $region68
        $region67: #{tpu_custom_call.1} parent=51 // pred_region
          %v1640 = vld [vmem:[%s4] sm:$0xff]
          %v1641 = vld [vmem:[%s4 + $0x8] sm:$0xff]
          %v1642 = vld [vmem:[%s4 + $0x10] sm:$0xff]
          %v1643 = vld [vmem:[%s4 + $0x18] sm:$0xff]
          %v1644 = vld [vmem:[%s5] sm:$0x1]
          %v1646 = vlaneseq
          %v1647 = vshrl.u32 %v1646, 7
          %v1648 = vsub.s32 0, %v1647
          %v1649 = vrot.slane %v1644, %v1648
          %v1652 = vsel %vm365, %v1543, 0
          %v1655 = vsel %vm365, %v1548, 0
          %v1658 = vsel %vm365, %v1624, 0
          %v1661 = vsel %vm365, %v1629, 0
          %v1664 = vsel %vm365, %v1640, 0
          %v1667 = vsel %vm365, %v1641, 0
          %v1670 = vsel %vm365, %v1642, 0
          %v1673 = vsel %vm365, %v1643, 0
          %1675 = vmatprep.subr.mxu0 0.0
          %1676 = vmatpush1.xpose.msra.mxu0 0.0
          %1677 = vmatprep.subr.mxu0 0.0
          %1678 = vmatpush1.xpose.msra.mxu0 0.0
          %1679 = vmatprep.subr.mxu0 0.0
          %1680 = vmatpush1.xpose.msra.mxu0 0.0
          %1681 = vmatprep.subr.mxu0 0.0
          %1682 = vmatpush1.xpose.msra.mxu0 0.0
          %1683 = vmatprep.subr.mxu0 0.0
          %1684 = vmatpush1.xpose.msra.mxu0 0.0
          %1685 = vmatprep.subr.mxu0 0.0
          %1686 = vmatpush1.xpose.msra.mxu0 0.0
          %1687 = vmatprep.subr.mxu0 0.0
          %1688 = vmatpush1.xpose.msra.mxu0 0.0
          %1689 = vmatprep.subr.mxu0 0.0
          %1690 = vmatpush1.xpose.msra.mxu0 0.0
          %1691 = vmatprep.subr.mxu0 0.0
          %1692 = vmatpush1.xpose.msra.mxu0 0.0
          %1693 = vmatprep.subr.mxu0 0.0
          %1694 = vmatpush1.xpose.msra.mxu0 0.0
          %1695 = vmatprep.subr.mxu0 0.0
          %1696 = vmatpush1.xpose.msra.mxu0 0.0
          %1697 = vmatprep.subr.mxu0 0.0
          %1698 = vmatpush1.xpose.msra.mxu0 0.0
          %1699 = vmatprep.subr.mxu0 0.0
          %1700 = vmatpush1.xpose.msra.mxu0 %v1673
          %1701 = vmatprep.subr.mxu0 0.0
          %1702 = vmatpush1.xpose.msra.mxu0 %v1670
          %1703 = vmatprep.subr.mxu0 0.0
          %1704 = vmatpush1.xpose.msra.mxu0 %v1667
          %1705 = vmatprep.subr.mxu0 0.0
          %1706 = vmatpush1.xpose.msra.mxu0 %v1664
          %1707 = vmatprep.subr.mxu0 0.0
          %1708 = vmatpush2.xpose.msra.mxu0 0.0
          %1709 = vmatprep.subr.mxu0 0.0
          %1710 = vmatpush2.xpose.msra.mxu0 0.0
          %1711 = vmatprep.subr.mxu0 0.0
          %1712 = vmatpush2.xpose.msra.mxu0 0.0
          %1713 = vmatprep.subr.mxu0 0.0
          %1714 = vmatpush2.xpose.msra.mxu0 0.0
          %1715 = vmatprep.subr.mxu0 0.0
          %1716 = vmatpush2.xpose.msra.mxu0 0.0
          %1717 = vmatprep.subr.mxu0 0.0
          %1718 = vmatpush2.xpose.msra.mxu0 0.0
          %1719 = vmatprep.subr.mxu0 0.0
          %1720 = vmatpush2.xpose.msra.mxu0 0.0
          %1721 = vmatprep.subr.mxu0 0.0
          %1722 = vmatpush2.xpose.msra.mxu0 0.0
          %1723 = vmatprep.subr.mxu0 0.0
          %1724 = vmatpush2.xpose.msra.mxu0 0.0
          %1725 = vmatprep.subr.mxu0 0.0
          %1726 = vmatpush2.xpose.msra.mxu0 0.0
          %1727 = vmatprep.subr.mxu0 0.0
          %1728 = vmatpush2.xpose.msra.mxu0 0.0
          %1729 = vmatprep.subr.mxu0 0.0
          %1730 = vmatpush2.xpose.msra.mxu0 0.0
          %1731 = vmatprep.subr.mxu0 0.0
          %1732 = vmatpush2.xpose.msra.mxu0 0.0
          %1733 = vmatprep.subr.mxu0 0.0
          %1734 = vmatpush2.xpose.msra.mxu0 0.0
          %1735 = vmatprep.subr.mxu0 0.0
          %1736 = vmatpush2.xpose.msra.mxu0 0.0
          %1737 = vmatprep.subr.mxu0 0.0
          %1738 = vmatpush2.xpose.msra.mxu0 0.0
          %1739 = vmatprep.mubr.f32.mxu0 0.0
          %1740 = vmatmul.mubr.f32.gmra.mxu0 %v1652
          %v1741 = vpop.f32.mrf.mxu0
          %v1742 = vadd.f32 %v1649, %v1741
          %v1743 = vpop.f32.mrf.mxu0
          %1744 = vmatprep.mubr.f32.mxu0 0.0
          %1745 = vmatmul.mubr.f32.gmra.mxu0 %v1655
          %v1746 = vpop.f32.mrf.mxu0
          %v1747 = vadd.f32 %v1649, %v1746
          %v1748 = vpop.f32.mrf.mxu0
          %1749 = vmatprep.mubr.f32.mxu0 0.0
          %1750 = vmatmul.mubr.f32.gmra.mxu0 %v1658
          %v1751 = vpop.f32.mrf.mxu0
          %v1752 = vadd.f32 %v1649, %v1751
          %v1753 = vpop.f32.mrf.mxu0
          %1754 = vmatprep.mubr.f32.mxu0 0.0
          %1755 = vmatmul.mubr.f32.gmra.mxu0 %v1661
          %v1756 = vpop.f32.mrf.mxu0
          %v1757 = vadd.f32 %v1649, %v1756
          %v1758 = vpop.f32.mrf.mxu0
          %1759 = vdwg.mxu0
          %1760 = vst.msk [vmem:[#allocation8] sm:$0xff] %vm365, %v1742
          %1761 = vst.msk [vmem:[#allocation8 + $0x8] sm:$0xff] %vm365, %v1747
          %1762 = vst.msk [vmem:[#allocation8 + $0x10] sm:$0xff] %vm365, %v1752
          %1763 = vst.msk [vmem:[#allocation8 + $0x18] sm:$0xff] %vm365, %v1757
        $region68: #{tpu_custom_call.1} parent=51 // pred_fallthru
          _
        // Predicated region
        $region69: #{tpu_custom_call.1} parent=51 // pred_check
          %p1764 = pneg %p213
        $region70: #{tpu_custom_call.1} parent=51 // pred_check_branch
          %1766 = sbr.rel (%p1764) target = $region72
        $region71: #{tpu_custom_call.1} parent=51 // pred_region
          %s1768 = ssub.s32 512, 512
          %1769 = vsyncadd [#allocation5], %s1768
          %s1770 = sshll.u32 [#allocation8], 4
          %s1771 = int_to_ptr.vmem [resolvable:$true] %s1770
          %1776 = dma.vmem_to_hbm [thread:$0]  %s1771, 512, %s8, [#allocation5], 128, 128, 8
        $region72: #{tpu_custom_call.1} parent=51 // pred_fallthru
          _
        // Predicated region
        $region73: #{tpu_custom_call.1} parent=51 // pred_check
          %p1777 = pneg %p213
        $region74: #{tpu_custom_call.1} parent=51 // pred_check_branch
          %1779 = sbr.rel (%p1777) target = $region76
        $region75: #{tpu_custom_call.1} parent=51 // pred_region
          %1780 = dma.done [#allocation5], 512
        $region76: #{tpu_custom_call.1} parent=51 // pred_fallthru
          _
      $region52: #{tpu_custom_call.1} parent=5 // pred_fallthru
        _
      %p1781 = scmp.le.s32.totalorder 2, %s17
      // Predicated region
      $region77: #{tpu_custom_call.1} parent=5 // pred_check
        %p1782 = pneg %p1781
      $region78: #{tpu_custom_call.1} parent=5 // pred_check_branch
        %1784 = sbr.rel (%p1782) target = $region80
      $region79: #{tpu_custom_call.1} parent=5 // pred_region
        %s1785 = ssub.s32 %s17, 2
      $region80: #{tpu_custom_call.1} parent=5 // pred_fallthru
        _
    $region6: #{tpu_custom_call.1} parent=1 // loop_footer
      %s21 = sadd.s32 1, %s17
    $region7: #{tpu_custom_call.1} parent=1 // loop_footer_branch
      %16 = sbr.rel target = $region3
    $region8: #{tpu_custom_call.1} parent=1 // loop_exit
      _
    %1786 = vsyncpa [#allocation4], 1
    %s1787 = scalar_lea.sflag [#allocation4], 1
    %1788 = vsyncpa %s1787, 1
    %1789 = vsyncpa [#allocation7], 1
    %1790 = vsyncpa [#allocation5], 1
    %s1791 = scalar_lea.sflag [#allocation5], 1
    %1792 = vsyncpa %s1791, 1

</llo_original>
